<compile_context>
chip_gen: v7x
topology: tpu7x:2x2x1
jax: 0.10.0
libtpu: 0.0.40
codegen_flags: <defaults>
</compile_context>

<pallas_src>
import functools

import jax
import jax.numpy as jnp
from jax import lax
from jax.experimental import pallas as pl
from jax.experimental.pallas import tpu as pltpu


def _round_up(v: int, m: int) -> int:
    return (v + m - 1) // m * m


def _vmem_capacity_bytes() -> int:
    """Physical per-core VMEM; conservative 64 MiB fallback (v7x)."""
    try:
        info = pltpu.get_tpu_info()
        cap = getattr(info, "vmem_capacity_bytes", None)
        if cap:
            return int(cap)
    except Exception:
        pass
    return 64 * 1024 * 1024


def _num_tensorcores() -> int:
    """TensorCores sharing the grid via 'parallel' axes (megacore chips)."""
    try:
        info = pltpu.get_tpu_info()
        for attr in ("num_cores", "tensorcores_per_chip", "cores_per_chip"):
            n = getattr(info, attr, None)
            if n:
                return int(n)
    except Exception:
        pass
    try:
        kind = jax.devices()[0].device_kind.lower()
    except Exception:
        return 1
    if "lite" in kind or "v5e" in kind or "v6e" in kind:
        return 1
    if any(t in kind for t in ("v4", "v5p", "v7")):
        return 2
    return 1


def _choose_batch_tiling(B: int, num_cores: int, sublane: int):
    """Split the batch across TensorCores only when each half has real rows."""
    if num_cores >= 2 and B >= sublane + 1:
        b_tile = _round_up(-(-B // 2), sublane)
        return 2, b_tile
    return 1, _round_up(B, 8)


def _vmem_bytes_needed(t_block, b_tile, Hp, G, gx_isz, whh_isz, y_isz):
    resident = Hp * G * whh_isz                       # W_hh^T (single-buffered)
    stream = 2 * t_block * b_tile * G * gx_isz        # gx block, double-buffered
    stream += 2 * t_block * b_tile * Hp * y_isz       # y block, double-buffered
    small = 2 * 2 * b_tile * Hp * 4                   # h0 / c0 blocks
    small += 2 * b_tile * Hp * 4                      # c_n output block
    small += 2 * b_tile * Hp * 4                      # h/c scratch
    return resident + stream + small


def _choose_t_block(T, b_tile, Hp, G, gx_isz, whh_isz, y_isz, budget):
    fixed = _vmem_bytes_needed(0, b_tile, Hp, G, gx_isz, whh_isz, y_isz)
    per_step = 2 * b_tile * (G * gx_isz + Hp * y_isz)
    avail = max(budget - fixed, per_step)
    tb = int(min(T, max(1, avail // per_step), 128))
    # Prefer a block size that divides T so the ragged-tail mask path is
    # never compiled in.
    for cand in range(tb, max(tb // 2, 1) - 1, -1):
        if T % cand == 0:
            return cand
    return tb


def _lstm_kernel(gx_ref, whh_ref, h0_ref, c0_ref, y_ref, cn_ref, h_sc, c_sc,
                 *, hidden_pad, t_block, seq_len, needs_mask, unroll):
    """One grid step = one (batch-tile, time-block).

    gx_ref : (T_BLK, B_TILE, 4*Hp)       precomputed x@W_ih^T + bias (bf16/f32)
    whh_ref: (Hp, 4*Hp)                  resident recurrent weights (VMEM)
    h0/c0  : (B_TILE, Hp) f32            initial state for this batch tile
    y_ref  : (T_BLK, B_TILE, Hp)         hidden outputs
    cn_ref : (B_TILE, Hp) f32            final cell state
    h_sc/c_sc: (B_TILE, Hp) f32          state carried across time blocks
    """
    t_blk = pl.program_id(1)
    n_t = pl.num_programs(1)
    Hp = hidden_pad

    @pl.when(t_blk == 0)
    def _():
        h_sc[...] = h0_ref[...]
        c_sc[...] = c0_ref[...]

    # Hoisted out of the step loop.
    whh = whh_ref[...]
    mm_dtype = whh_ref.dtype

    def make_step(masked):
        def step(j, carry):
            h, c = carry
            # (B_TILE, 4*Hp) f32 = input gates + recurrent matmul (f32 acc).
            gates = gx_ref[j].astype(jnp.float32) + jnp.dot(
                h.astype(mm_dtype), whh, preferred_element_type=jnp.float32)
            # sigmoid(x) = 0.5*(tanh(0.5*x)+1): one EUP op instead of two.
            # Lane-aligned gate slices (Hp is a multiple of 128).  i*g and f*c
            # are consumed before o_g is materialized (vreg pressure).
            i_g = 0.5 * (jnp.tanh(0.5 * gates[:, 0 * Hp:1 * Hp]) + 1.0)
            f_g = 0.5 * (jnp.tanh(0.5 * gates[:, 1 * Hp:2 * Hp]) + 1.0)
            g_g = jnp.tanh(gates[:, 2 * Hp:3 * Hp])
            c_new = f_g * c + i_g * g_g
            o_g = 0.5 * (jnp.tanh(0.5 * gates[:, 3 * Hp:4 * Hp]) + 1.0)
            h_new = o_g * jnp.tanh(c_new)
            if masked:  # only compiled for the final (ragged) time block
                valid = (t_blk * t_block + j) < seq_len
                c_new = jnp.where(valid, c_new, c)
                h_new = jnp.where(valid, h_new, h)
            y_ref[j] = h_new.astype(y_ref.dtype)
            return (h_new, c_new)
        return step

    def run(masked):
        h, c = lax.fori_loop(0, t_block, make_step(masked),
                             (h_sc[...], c_sc[...]), unroll=unroll)
        h_sc[...] = h
        c_sc[...] = c
        return c

    if needs_mask:
        # Steady-state blocks: no masking on the serial dependency chain.
        @pl.when(t_blk != n_t - 1)
        def _():
            run(False)

        # Final (possibly partial) block: masked steps + c_n writeback.
        @pl.when(t_blk == n_t - 1)
        def _():
            c = run(True)
            cn_ref[...] = c.astype(cn_ref.dtype)
    else:
        c = run(False)

        @pl.when(t_blk == n_t - 1)
        def _():
            cn_ref[...] = c.astype(cn_ref.dtype)


def lstm_layer_forward(x, params, hx=None, *,
                       matmul_dtype=jnp.bfloat16, t_block=None):
    """Equivalent to LSTMLayer(batch_first=False, bidirectional=False,
    proj_size=0).forward(x, hx).

    x: (T, B, input_size) float32
    params: dict with w_ih (4H, I), w_hh (4H, H), b_ih (4H,), b_hh (4H,)
    hx: optional (h_0, c_0), each (1, B, H)

    Returns (y, (h_n, c_n)) with y: (T, B, H), h_n: (1, B, H) in x.dtype,
    c_n: (1, B, H) in the parameter dtype (float32).
    """
    T, B, I = x.shape
    w_ih = jnp.asarray(params["w_ih"], jnp.float32)   # (4H, I)
    w_hh = jnp.asarray(params["w_hh"], jnp.float32)   # (4H, H)
    b_ih = jnp.asarray(params["b_ih"], jnp.float32)   # (4H,)
    b_hh = jnp.asarray(params["b_hh"], jnp.float32)   # (4H,)
    H = w_hh.shape[1]

    if hx is None:
        h0 = jnp.zeros((1, B, H), jnp.float32)
        c0 = jnp.zeros((1, B, H), jnp.float32)
    else:
        h0, c0 = hx

    # --- Padded, lane-aligned layouts -------------------------------------
    Hp = max(_round_up(H, 128), 128)      # each gate occupies Hp lanes
    G = 4 * Hp
    gx_dtype = jnp.bfloat16 if matmul_dtype == jnp.bfloat16 else jnp.float32
    gx_isz = jnp.dtype(gx_dtype).itemsize
    whh_isz = jnp.dtype(matmul_dtype).itemsize
    y_isz = jnp.dtype(x.dtype).itemsize

    num_cores = _num_tensorcores()
    sublane = 16 if gx_isz == 2 else 8
    num_b, b_tile = _choose_batch_tiling(B, num_cores, sublane)
    Bp = num_b * b_tile

    # W_ih^T padded to (I, 4*Hp): column g*Hp+n holds W_ih[g*H+n, :] (n < H).
    w_ih4 = jnp.pad(w_ih.reshape(4, H, I), ((0, 0), (0, Hp - H), (0, 0)))
    wih_t = w_ih4.transpose(2, 0, 1).reshape(I, G).astype(matmul_dtype)
    # W_hh^T padded to (Hp, 4*Hp), cast to MXU-native dtype.
    w_hh4 = jnp.pad(w_hh.reshape(4, H, H),
                    ((0, 0), (0, Hp - H), (0, Hp - H)))
    whh_t = w_hh4.transpose(2, 0, 1).reshape(Hp, G).astype(matmul_dtype)
    # Combined bias, padded with zeros in the padded gate columns.
    bias_p = jnp.pad((b_ih + b_hh).reshape(4, H),
                     ((0, 0), (0, Hp - H))).reshape(1, G)

    # --- Hoisted input projection: one big GEMM (no sequential dependency) -
    # bf16 operands (MXU-native), f32 accumulation; bias added in f32.
    x_mm = jnp.asarray(x, matmul_dtype)
    gx = jnp.dot(x_mm.reshape(T * B, I), wih_t,
                 preferred_element_type=jnp.float32) + bias_p
    gx = gx.reshape(T, B, G).astype(gx_dtype)

    # --- VMEM budget / time blocking ---------------------------------------
    phys_vmem = _vmem_capacity_bytes()
    budget = int(phys_vmem * 0.75)
    if t_block is None:
        t_block = _choose_t_block(T, b_tile, Hp, G, gx_isz, whh_isz, y_isz,
                                  budget)
    num_t = pl.cdiv(T, t_block)
    Tp = num_t * t_block
    unroll = max(1, min(t_block, 8))      # partial unroll: code size / vregs

    needed = _vmem_bytes_needed(t_block, b_tile, Hp, G, gx_isz, whh_isz, y_isz)
    vmem_limit = max(needed + (4 << 20), 16 << 20)
    vmem_limit = min(vmem_limit, int(phys_vmem * 0.9))

    gx = jnp.pad(gx, ((0, Tp - T), (0, Bp - B), (0, 0)))
    h0_p = jnp.pad(jnp.asarray(h0, jnp.float32)[0],
                   ((0, Bp - B), (0, Hp - H)))
    c0_p = jnp.pad(jnp.asarray(c0, jnp.float32)[0],
                   ((0, Bp - B), (0, Hp - H)))

    kernel = functools.partial(
        _lstm_kernel, hidden_pad=Hp, t_block=t_block, seq_len=T,
        needs_mask=(Tp != T), unroll=unroll)

    # Grid order is (batch, time): time MUST stay innermost/"arbitrary" so the
    # scratch-carried h/c state is re-initialized at t==0 for each batch tile.
    grid_spec = pltpu.PrefetchScalarGridSpec(
        num_scalar_prefetch=0,
        grid=(num_b, num_t),
        in_specs=[
            # pipelined per (batch-tile, time-block) gates_x slab
            pl.BlockSpec((t_block, b_tile, G), lambda b, t: (t, b, 0)),
            # resident recurrent weights: whole array in VMEM, single-buffered
            pl.BlockSpec(memory_space=pltpu.MemorySpace.VMEM),
            pl.BlockSpec((b_tile, Hp), lambda b, t: (b, 0)),   # h_0
            pl.BlockSpec((b_tile, Hp), lambda b, t: (b, 0)),   # c_0
        ],
        out_specs=[
            pl.BlockSpec((t_block, b_tile, Hp), lambda b, t: (t, b, 0)),  # y
            pl.BlockSpec((b_tile, Hp), lambda b, t: (b, 0)),              # c_n
        ],
        scratch_shapes=[
            pltpu.VMEM((b_tile, Hp), jnp.float32),   # h state
            pltpu.VMEM((b_tile, Hp), jnp.float32),   # c state
        ],
    )

    y_pad, cn_pad = pl.pallas_call(
        kernel,
        grid_spec=grid_spec,
        out_shape=(
            jax.ShapeDtypeStruct((Tp, Bp, Hp), x.dtype),
            jax.ShapeDtypeStruct((Bp, Hp), jnp.float32),
        ),
        compiler_params=pltpu.CompilerParams(
            dimension_semantics=("parallel", "arbitrary"),
            vmem_limit_bytes=int(vmem_limit),
        ),
    )(gx, whh_t, h0_p, c0_p)

    y = y_pad[:T, :B, :H]
    h_n = y[T - 1:T]                      # h_n is just the last output row
    c_n = cn_pad[:B, :H][None]            # kept in the parameter dtype (f32)
    return y, (h_n, c_n)


def _lstm_ref(x, params, hx):
    """Pure-JAX f32 reference (PyTorch nn.LSTM semantics, gate order i,f,g,o)."""
    w_ih, w_hh, b_ih, b_hh = (params["w_ih"], params["w_hh"],
                              params["b_ih"], params["b_hh"])
    H = w_hh.shape[1]
    h0, c0 = hx
    h, c = h0[0], c0[0]

    def step(carry, x_t):
        h, c = carry
        gates = x_t @ w_ih.T + b_ih + h @ w_hh.T + b_hh
        i = jax.nn.sigmoid(gates[:, 0 * H:1 * H])
        f = jax.nn.sigmoid(gates[:, 1 * H:2 * H])
        g = jnp.tanh(gates[:, 2 * H:3 * H])
        o = jax.nn.sigmoid(gates[:, 3 * H:4 * H])
        c_new = f * c + i * g
        h_new = o * jnp.tanh(c_new)
        return (h_new, c_new), h_new

    (h_n, c_n), ys = jax.lax.scan(step, (h, c), x)
    return ys, (h_n[None], c_n[None])


if __name__ == "__main__":
    # Small shapes implied by the forward: x is (seq, batch, input_size).
    T, B, I, H = 8, 2, 8, 32

    key = jax.random.PRNGKey(0)
    k_x, k_wi, k_wh, k_bi, k_bh, k_x2, k_h, k_c = jax.random.split(key, 8)

    bound = 1.0 / jnp.sqrt(jnp.float32(H))
    params = {
        "w_ih": jax.random.uniform(k_wi, (4 * H, I), jnp.float32, -bound, bound),
        "w_hh": jax.random.uniform(k_wh, (4 * H, H), jnp.float32, -bound, bound),
        "b_ih": jax.random.uniform(k_bi, (4 * H,), jnp.float32, -bound, bound),
        "b_hh": jax.random.uniform(k_bh, (4 * H,), jnp.float32, -bound, bound),
    }

    x = jax.random.normal(k_x, (T, B, I), jnp.float32)
    h0 = jnp.zeros((1, B, H), jnp.float32)
    c0 = jnp.zeros((1, B, H), jnp.float32)

    y_ref, (h_ref, c_ref) = _lstm_ref(x, params, (h0, c0))

    # 1) f32 path: must match the reference at f32-level accuracy.
    y32, (hn32, cn32) = lstm_layer_forward(x, params, (h0, c0),
                                           matmul_dtype=jnp.float32)
    jax.block_until_ready((y32, hn32, cn32))
    assert jnp.allclose(y32, y_ref, atol=1e-4, rtol=1e-4)
    assert jnp.allclose(hn32, h_ref, atol=1e-4, rtol=1e-4)
    assert jnp.allclose(cn32, c_ref, atol=1e-4, rtol=1e-4)

    # 2) Default bf16 path (bf16 input GEMM, bf16 gx stream, bf16 recurrent
    #    weights; f32 accumulation/state): relaxed tolerance vs f32 reference.
    #    NOTE: error compounds through the recurrence; re-validate drift at
    #    realistic sequence lengths before relying on bf16 for long T.
    y16, (hn16, cn16) = lstm_layer_forward(x, params, (h0, c0))
    jax.block_until_ready((y16, hn16, cn16))
    assert jnp.allclose(y16, y_ref, atol=5e-2, rtol=5e-2)
    assert jnp.allclose(hn16, h_ref, atol=5e-2, rtol=5e-2)
    assert jnp.allclose(cn16, c_ref, atol=5e-2, rtol=5e-2)

    # 3) Ragged sequence (T not divisible by the time block) with a non-zero
    #    initial state, exercising the tail-only masked path.
    T2 = 5
    x2 = jax.random.normal(k_x2, (T2, B, I), jnp.float32)
    h02 = jnp.tanh(jax.random.normal(k_h, (1, B, H), jnp.float32))
    c02 = 0.5 * jax.random.normal(k_c, (1, B, H), jnp.float32)
    y2, (hn2, cn2) = lstm_layer_forward(x2, params, (h02, c02),
                                        matmul_dtype=jnp.float32, t_block=4)
    jax.block_until_ready((y2, hn2, cn2))
    y2_ref, (h2_ref, c2_ref) = _lstm_ref(x2, params, (h02, c02))
    assert jnp.allclose(y2, y2_ref, atol=1e-4, rtol=1e-4)
    assert jnp.allclose(hn2, h2_ref, atol=1e-4, rtol=1e-4)
    assert jnp.allclose(cn2, c2_ref, atol=1e-4, rtol=1e-4)

    print("KERNEL_OK")
</pallas_src>

<mosaic_0001>
module attributes {stable_mosaic.version = 11 : i64} {
  func.func @_lstm_kernel(%arg0: i32, %arg1: i32, %arg2: memref<8x8x512xf32, #tpu.memory_space<vmem>>, %arg3: memref<128x512xf32, #tpu.memory_space<vmem>>, %arg4: memref<8x128xf32, #tpu.memory_space<vmem>>, %arg5: memref<8x128xf32, #tpu.memory_space<vmem>>, %arg6: memref<8x8x128xf32, #tpu.memory_space<vmem>>, %arg7: memref<8x128xf32, #tpu.memory_space<vmem>>, %arg8: memref<8x128xf32, #tpu.memory_space<vmem>>, %arg9: memref<8x128xf32, #tpu.memory_space<vmem>>) attributes {dimension_semantics = [#tpu.dimension_semantics<parallel>, #tpu.dimension_semantics<arbitrary>], iteration_bounds = array<i64: 1, 1>, scalar_prefetch = 0 : i64, scratch_operands = 2 : i64, tpu.core_type = #tpu.core_type<tc>, window_params = [{transform_indices = @transform_0, window_bounds = array<i64: 8, 8, 512>}, {pipeline_mode = #tpu.pipeline_mode<synchronous>, transform_indices = @transform_1, window_bounds = array<i64: 128, 512>}, {transform_indices = @transform_2, window_bounds = array<i64: 8, 128>}, {transform_indices = @transform_3, window_bounds = array<i64: 8, 128>}, {transform_indices = @transform_4, window_bounds = array<i64: 8, 8, 128>}, {transform_indices = @transform_5, window_bounds = array<i64: 8, 128>}]} {
    %c0_i32 = arith.constant 0 : i32
    %0 = arith.cmpi eq, %arg1, %c0_i32 : i32
    %1 = arith.extui %0 : i1 to i32
    %c0_i32_0 = arith.constant 0 : i32
    %2 = arith.cmpi ne, %1, %c0_i32_0 : i32
    scf.if %2 {
      %c0_124 = arith.constant 0 : index
      %c0_125 = arith.constant 0 : index
      %331 = vector.load %arg4[%c0_124, %c0_125] : memref<8x128xf32, #tpu.memory_space<vmem>>, vector<8x128xf32>
      %c0_126 = arith.constant 0 : index
      %c0_127 = arith.constant 0 : index
      %332 = vector.load %arg8[%c0_126, %c0_127] : memref<8x128xf32, #tpu.memory_space<vmem>>, vector<8x128xf32>
      tpu.vector_store %arg8[%c0_126, %c0_127], %331 {strides = array<i32>} : memref<8x128xf32, #tpu.memory_space<vmem>>, vector<8x128xf32>,
      %c0_128 = arith.constant 0 : index
      %c0_129 = arith.constant 0 : index
      %333 = vector.load %arg5[%c0_128, %c0_129] : memref<8x128xf32, #tpu.memory_space<vmem>>, vector<8x128xf32>
      %c0_130 = arith.constant 0 : index
      %c0_131 = arith.constant 0 : index
      %334 = vector.load %arg9[%c0_130, %c0_131] : memref<8x128xf32, #tpu.memory_space<vmem>>, vector<8x128xf32>
      tpu.vector_store %arg9[%c0_130, %c0_131], %333 {strides = array<i32>} : memref<8x128xf32, #tpu.memory_space<vmem>>, vector<8x128xf32>,
    } else {
    }
    %c0 = arith.constant 0 : index
    %c0_1 = arith.constant 0 : index
    %3 = vector.load %arg3[%c0, %c0_1] : memref<128x512xf32, #tpu.memory_space<vmem>>, vector<128x512xf32>
    %c0_2 = arith.constant 0 : index
    %c0_3 = arith.constant 0 : index
    %4 = vector.load %arg8[%c0_2, %c0_3] : memref<8x128xf32, #tpu.memory_space<vmem>>, vector<8x128xf32>
    %c0_4 = arith.constant 0 : index
    %c0_5 = arith.constant 0 : index
    %5 = vector.load %arg9[%c0_4, %c0_5] : memref<8x128xf32, #tpu.memory_space<vmem>>, vector<8x128xf32>
    %c0_i32_6 = arith.constant 0 : i32
    %6 = arith.index_cast %c0_i32_6 : i32 to index
    %c0_7 = arith.constant 0 : index
    %c0_8 = arith.constant 0 : index
    %7 = vector.load %arg2[%6, %c0_7, %c0_8] : memref<8x8x512xf32, #tpu.memory_space<vmem>>, vector<1x8x512xf32>
    %8 = vector.shape_cast %7 : vector<1x8x512xf32> to vector<8x512xf32>
    %cst = arith.constant dense<0.000000e+00> : vector<8x512xf32>
    %9 = tpu.matmul %4, %3, %cst {dimension_numbers = #tpu.dot_dimension_numbers<[1], [0], [0], [1], [0, 0, 1, 1], [], []>} : vector<8x128xf32>, vector<128x512xf32>, vector<8x512xf32> -> vector<8x512xf32>
    %10 = arith.addf %8, %9 : vector<8x512xf32>
    %11 = vector.extract_strided_slice %10 {offsets = [0, 0], sizes = [8, 128], strides = [1, 1]} : vector<8x512xf32> to vector<8x128xf32>
    %cst_9 = arith.constant 5.000000e-01 : f32
    %12 = vector.broadcast %cst_9 : f32 to vector<8x128xf32>
    %13 = arith.mulf %12, %11 : vector<8x128xf32>
    %14 = math.tanh %13 : vector<8x128xf32>
    %cst_10 = arith.constant 1.000000e+00 : f32
    %15 = vector.broadcast %cst_10 : f32 to vector<8x128xf32>
    %16 = arith.addf %14, %15 : vector<8x128xf32>
    %cst_11 = arith.constant 5.000000e-01 : f32
    %17 = vector.broadcast %cst_11 : f32 to vector<8x128xf32>
    %18 = arith.mulf %17, %16 : vector<8x128xf32>
    %19 = vector.extract_strided_slice %10 {offsets = [0, 128], sizes = [8, 128], strides = [1, 1]} : vector<8x512xf32> to vector<8x128xf32>
    %cst_12 = arith.constant 5.000000e-01 : f32
    %20 = vector.broadcast %cst_12 : f32 to vector<8x128xf32>
    %21 = arith.mulf %20, %19 : vector<8x128xf32>
    %22 = math.tanh %21 : vector<8x128xf32>
    %cst_13 = arith.constant 1.000000e+00 : f32
    %23 = vector.broadcast %cst_13 : f32 to vector<8x128xf32>
    %24 = arith.addf %22, %23 : vector<8x128xf32>
    %cst_14 = arith.constant 5.000000e-01 : f32
    %25 = vector.broadcast %cst_14 : f32 to vector<8x128xf32>
    %26 = arith.mulf %25, %24 : vector<8x128xf32>
    %27 = vector.extract_strided_slice %10 {offsets = [0, 256], sizes = [8, 128], strides = [1, 1]} : vector<8x512xf32> to vector<8x128xf32>
    %28 = math.tanh %27 : vector<8x128xf32>
    %29 = arith.mulf %26, %5 : vector<8x128xf32>
    %30 = arith.mulf %18, %28 : vector<8x128xf32>
    %31 = arith.addf %29, %30 : vector<8x128xf32>
    %32 = vector.extract_strided_slice %10 {offsets = [0, 384], sizes = [8, 128], strides = [1, 1]} : vector<8x512xf32> to vector<8x128xf32>
    %cst_15 = arith.constant 5.000000e-01 : f32
    %33 = vector.broadcast %cst_15 : f32 to vector<8x128xf32>
    %34 = arith.mulf %33, %32 : vector<8x128xf32>
    %35 = math.tanh %34 : vector<8x128xf32>
    %cst_16 = arith.constant 1.000000e+00 : f32
    %36 = vector.broadcast %cst_16 : f32 to vector<8x128xf32>
    %37 = arith.addf %35, %36 : vector<8x128xf32>
    %cst_17 = arith.constant 5.000000e-01 : f32
    %38 = vector.broadcast %cst_17 : f32 to vector<8x128xf32>
    %39 = arith.mulf %38, %37 : vector<8x128xf32>
    %40 = math.tanh %31 : vector<8x128xf32>
    %41 = arith.mulf %39, %40 : vector<8x128xf32>
    %42 = arith.index_cast %c0_i32_6 : i32 to index
    %c0_18 = arith.constant 0 : index
    %c0_19 = arith.constant 0 : index
    %43 = vector.load %arg6[%42, %c0_18, %c0_19] : memref<8x8x128xf32, #tpu.memory_space<vmem>>, vector<1x8x128xf32>
    %44 = vector.shape_cast %43 : vector<1x8x128xf32> to vector<8x128xf32>
    %45 = vector.shape_cast %41 : vector<8x128xf32> to vector<1x8x128xf32>
    tpu.vector_store %arg6[%42, %c0_18, %c0_19], %45 {strides = array<i32>} : memref<8x8x128xf32, #tpu.memory_space<vmem>>, vector<1x8x128xf32>,
    %c1_i32 = arith.constant 1 : i32
    %46 = arith.index_cast %c1_i32 : i32 to index
    %c0_20 = arith.constant 0 : index
    %c0_21 = arith.constant 0 : index
    %47 = vector.load %arg2[%46, %c0_20, %c0_21] : memref<8x8x512xf32, #tpu.memory_space<vmem>>, vector<1x8x512xf32>
    %48 = vector.shape_cast %47 : vector<1x8x512xf32> to vector<8x512xf32>
    %cst_22 = arith.constant dense<0.000000e+00> : vector<8x512xf32>
    %49 = tpu.matmul %41, %3, %cst_22 {dimension_numbers = #tpu.dot_dimension_numbers<[1], [0], [0], [1], [0, 0, 1, 1], [], []>} : vector<8x128xf32>, vector<128x512xf32>, vector<8x512xf32> -> vector<8x512xf32>
    %50 = arith.addf %48, %49 : vector<8x512xf32>
    %51 = vector.extract_strided_slice %50 {offsets = [0, 0], sizes = [8, 128], strides = [1, 1]} : vector<8x512xf32> to vector<8x128xf32>
    %cst_23 = arith.constant 5.000000e-01 : f32
    %52 = vector.broadcast %cst_23 : f32 to vector<8x128xf32>
    %53 = arith.mulf %52, %51 : vector<8x128xf32>
    %54 = math.tanh %53 : vector<8x128xf32>
    %cst_24 = arith.constant 1.000000e+00 : f32
    %55 = vector.broadcast %cst_24 : f32 to vector<8x128xf32>
    %56 = arith.addf %54, %55 : vector<8x128xf32>
    %cst_25 = arith.constant 5.000000e-01 : f32
    %57 = vector.broadcast %cst_25 : f32 to vector<8x128xf32>
    %58 = arith.mulf %57, %56 : vector<8x128xf32>
    %59 = vector.extract_strided_slice %50 {offsets = [0, 128], sizes = [8, 128], strides = [1, 1]} : vector<8x512xf32> to vector<8x128xf32>
    %cst_26 = arith.constant 5.000000e-01 : f32
    %60 = vector.broadcast %cst_26 : f32 to vector<8x128xf32>
    %61 = arith.mulf %60, %59 : vector<8x128xf32>
    %62 = math.tanh %61 : vector<8x128xf32>
    %cst_27 = arith.constant 1.000000e+00 : f32
    %63 = vector.broadcast %cst_27 : f32 to vector<8x128xf32>
    %64 = arith.addf %62, %63 : vector<8x128xf32>
    %cst_28 = arith.constant 5.000000e-01 : f32
    %65 = vector.broadcast %cst_28 : f32 to vector<8x128xf32>
    %66 = arith.mulf %65, %64 : vector<8x128xf32>
    %67 = vector.extract_strided_slice %50 {offsets = [0, 256], sizes = [8, 128], strides = [1, 1]} : vector<8x512xf32> to vector<8x128xf32>
    %68 = math.tanh %67 : vector<8x128xf32>
    %69 = arith.mulf %66, %31 : vector<8x128xf32>
    %70 = arith.mulf %58, %68 : vector<8x128xf32>
    %71 = arith.addf %69, %70 : vector<8x128xf32>
    %72 = vector.extract_strided_slice %50 {offsets = [0, 384], sizes = [8, 128], strides = [1, 1]} : vector<8x512xf32> to vector<8x128xf32>
    %cst_29 = arith.constant 5.000000e-01 : f32
    %73 = vector.broadcast %cst_29 : f32 to vector<8x128xf32>
    %74 = arith.mulf %73, %72 : vector<8x128xf32>
    %75 = math.tanh %74 : vector<8x128xf32>
    %cst_30 = arith.constant 1.000000e+00 : f32
    %76 = vector.broadcast %cst_30 : f32 to vector<8x128xf32>
    %77 = arith.addf %75, %76 : vector<8x128xf32>
    %cst_31 = arith.constant 5.000000e-01 : f32
    %78 = vector.broadcast %cst_31 : f32 to vector<8x128xf32>
    %79 = arith.mulf %78, %77 : vector<8x128xf32>
    %80 = math.tanh %71 : vector<8x128xf32>
    %81 = arith.mulf %79, %80 : vector<8x128xf32>
    %82 = arith.index_cast %c1_i32 : i32 to index
    %c0_32 = arith.constant 0 : index
    %c0_33 = arith.constant 0 : index
    %83 = vector.load %arg6[%82, %c0_32, %c0_33] : memref<8x8x128xf32, #tpu.memory_space<vmem>>, vector<1x8x128xf32>
    %84 = vector.shape_cast %83 : vector<1x8x128xf32> to vector<8x128xf32>
    %85 = vector.shape_cast %81 : vector<8x128xf32> to vector<1x8x128xf32>
    tpu.vector_store %arg6[%82, %c0_32, %c0_33], %85 {strides = array<i32>} : memref<8x8x128xf32, #tpu.memory_space<vmem>>, vector<1x8x128xf32>,
    %c2_i32 = arith.constant 2 : i32
    %86 = arith.index_cast %c2_i32 : i32 to index
    %c0_34 = arith.constant 0 : index
    %c0_35 = arith.constant 0 : index
    %87 = vector.load %arg2[%86, %c0_34, %c0_35] : memref<8x8x512xf32, #tpu.memory_space<vmem>>, vector<1x8x512xf32>
    %88 = vector.shape_cast %87 : vector<1x8x512xf32> to vector<8x512xf32>
    %cst_36 = arith.constant dense<0.000000e+00> : vector<8x512xf32>
    %89 = tpu.matmul %81, %3, %cst_36 {dimension_numbers = #tpu.dot_dimension_numbers<[1], [0], [0], [1], [0, 0, 1, 1], [], []>} : vector<8x128xf32>, vector<128x512xf32>, vector<8x512xf32> -> vector<8x512xf32>
    %90 = arith.addf %88, %89 : vector<8x512xf32>
    %91 = vector.extract_strided_slice %90 {offsets = [0, 0], sizes = [8, 128], strides = [1, 1]} : vector<8x512xf32> to vector<8x128xf32>
    %cst_37 = arith.constant 5.000000e-01 : f32
    %92 = vector.broadcast %cst_37 : f32 to vector<8x128xf32>
    %93 = arith.mulf %92, %91 : vector<8x128xf32>
    %94 = math.tanh %93 : vector<8x128xf32>
    %cst_38 = arith.constant 1.000000e+00 : f32
    %95 = vector.broadcast %cst_38 : f32 to vector<8x128xf32>
    %96 = arith.addf %94, %95 : vector<8x128xf32>
    %cst_39 = arith.constant 5.000000e-01 : f32
    %97 = vector.broadcast %cst_39 : f32 to vector<8x128xf32>
    %98 = arith.mulf %97, %96 : vector<8x128xf32>
    %99 = vector.extract_strided_slice %90 {offsets = [0, 128], sizes = [8, 128], strides = [1, 1]} : vector<8x512xf32> to vector<8x128xf32>
    %cst_40 = arith.constant 5.000000e-01 : f32
    %100 = vector.broadcast %cst_40 : f32 to vector<8x128xf32>
    %101 = arith.mulf %100, %99 : vector<8x128xf32>
    %102 = math.tanh %101 : vector<8x128xf32>
    %cst_41 = arith.constant 1.000000e+00 : f32
    %103 = vector.broadcast %cst_41 : f32 to vector<8x128xf32>
    %104 = arith.addf %102, %103 : vector<8x128xf32>
    %cst_42 = arith.constant 5.000000e-01 : f32
    %105 = vector.broadcast %cst_42 : f32 to vector<8x128xf32>
    %106 = arith.mulf %105, %104 : vector<8x128xf32>
    %107 = vector.extract_strided_slice %90 {offsets = [0, 256], sizes = [8, 128], strides = [1, 1]} : vector<8x512xf32> to vector<8x128xf32>
    %108 = math.tanh %107 : vector<8x128xf32>
    %109 = arith.mulf %106, %71 : vector<8x128xf32>
    %110 = arith.mulf %98, %108 : vector<8x128xf32>
    %111 = arith.addf %109, %110 : vector<8x128xf32>
    %112 = vector.extract_strided_slice %90 {offsets = [0, 384], sizes = [8, 128], strides = [1, 1]} : vector<8x512xf32> to vector<8x128xf32>
    %cst_43 = arith.constant 5.000000e-01 : f32
    %113 = vector.broadcast %cst_43 : f32 to vector<8x128xf32>
    %114 = arith.mulf %113, %112 : vector<8x128xf32>
    %115 = math.tanh %114 : vector<8x128xf32>
    %cst_44 = arith.constant 1.000000e+00 : f32
    %116 = vector.broadcast %cst_44 : f32 to vector<8x128xf32>
    %117 = arith.addf %115, %116 : vector<8x128xf32>
    %cst_45 = arith.constant 5.000000e-01 : f32
    %118 = vector.broadcast %cst_45 : f32 to vector<8x128xf32>
    %119 = arith.mulf %118, %117 : vector<8x128xf32>
    %120 = math.tanh %111 : vector<8x128xf32>
    %121 = arith.mulf %119, %120 : vector<8x128xf32>
    %122 = arith.index_cast %c2_i32 : i32 to index
    %c0_46 = arith.constant 0 : index
    %c0_47 = arith.constant 0 : index
    %123 = vector.load %arg6[%122, %c0_46, %c0_47] : memref<8x8x128xf32, #tpu.memory_space<vmem>>, vector<1x8x128xf32>
    %124 = vector.shape_cast %123 : vector<1x8x128xf32> to vector<8x128xf32>
    %125 = vector.shape_cast %121 : vector<8x128xf32> to vector<1x8x128xf32>
    tpu.vector_store %arg6[%122, %c0_46, %c0_47], %125 {strides = array<i32>} : memref<8x8x128xf32, #tpu.memory_space<vmem>>, vector<1x8x128xf32>,
    %c3_i32 = arith.constant 3 : i32
    %126 = arith.index_cast %c3_i32 : i32 to index
    %c0_48 = arith.constant 0 : index
    %c0_49 = arith.constant 0 : index
    %127 = vector.load %arg2[%126, %c0_48, %c0_49] : memref<8x8x512xf32, #tpu.memory_space<vmem>>, vector<1x8x512xf32>
    %128 = vector.shape_cast %127 : vector<1x8x512xf32> to vector<8x512xf32>
    %cst_50 = arith.constant dense<0.000000e+00> : vector<8x512xf32>
    %129 = tpu.matmul %121, %3, %cst_50 {dimension_numbers = #tpu.dot_dimension_numbers<[1], [0], [0], [1], [0, 0, 1, 1], [], []>} : vector<8x128xf32>, vector<128x512xf32>, vector<8x512xf32> -> vector<8x512xf32>
    %130 = arith.addf %128, %129 : vector<8x512xf32>
    %131 = vector.extract_strided_slice %130 {offsets = [0, 0], sizes = [8, 128], strides = [1, 1]} : vector<8x512xf32> to vector<8x128xf32>
    %cst_51 = arith.constant 5.000000e-01 : f32
    %132 = vector.broadcast %cst_51 : f32 to vector<8x128xf32>
    %133 = arith.mulf %132, %131 : vector<8x128xf32>
    %134 = math.tanh %133 : vector<8x128xf32>
    %cst_52 = arith.constant 1.000000e+00 : f32
    %135 = vector.broadcast %cst_52 : f32 to vector<8x128xf32>
    %136 = arith.addf %134, %135 : vector<8x128xf32>
    %cst_53 = arith.constant 5.000000e-01 : f32
    %137 = vector.broadcast %cst_53 : f32 to vector<8x128xf32>
    %138 = arith.mulf %137, %136 : vector<8x128xf32>
    %139 = vector.extract_strided_slice %130 {offsets = [0, 128], sizes = [8, 128], strides = [1, 1]} : vector<8x512xf32> to vector<8x128xf32>
    %cst_54 = arith.constant 5.000000e-01 : f32
    %140 = vector.broadcast %cst_54 : f32 to vector<8x128xf32>
    %141 = arith.mulf %140, %139 : vector<8x128xf32>
    %142 = math.tanh %141 : vector<8x128xf32>
    %cst_55 = arith.constant 1.000000e+00 : f32
    %143 = vector.broadcast %cst_55 : f32 to vector<8x128xf32>
    %144 = arith.addf %142, %143 : vector<8x128xf32>
    %cst_56 = arith.constant 5.000000e-01 : f32
    %145 = vector.broadcast %cst_56 : f32 to vector<8x128xf32>
    %146 = arith.mulf %145, %144 : vector<8x128xf32>
    %147 = vector.extract_strided_slice %130 {offsets = [0, 256], sizes = [8, 128], strides = [1, 1]} : vector<8x512xf32> to vector<8x128xf32>
    %148 = math.tanh %147 : vector<8x128xf32>
    %149 = arith.mulf %146, %111 : vector<8x128xf32>
    %150 = arith.mulf %138, %148 : vector<8x128xf32>
    %151 = arith.addf %149, %150 : vector<8x128xf32>
    %152 = vector.extract_strided_slice %130 {offsets = [0, 384], sizes = [8, 128], strides = [1, 1]} : vector<8x512xf32> to vector<8x128xf32>
    %cst_57 = arith.constant 5.000000e-01 : f32
    %153 = vector.broadcast %cst_57 : f32 to vector<8x128xf32>
    %154 = arith.mulf %153, %152 : vector<8x128xf32>
    %155 = math.tanh %154 : vector<8x128xf32>
    %cst_58 = arith.constant 1.000000e+00 : f32
    %156 = vector.broadcast %cst_58 : f32 to vector<8x128xf32>
    %157 = arith.addf %155, %156 : vector<8x128xf32>
    %cst_59 = arith.constant 5.000000e-01 : f32
    %158 = vector.broadcast %cst_59 : f32 to vector<8x128xf32>
    %159 = arith.mulf %158, %157 : vector<8x128xf32>
    %160 = math.tanh %151 : vector<8x128xf32>
    %161 = arith.mulf %159, %160 : vector<8x128xf32>
    %162 = arith.index_cast %c3_i32 : i32 to index
    %c0_60 = arith.constant 0 : index
    %c0_61 = arith.constant 0 : index
    %163 = vector.load %arg6[%162, %c0_60, %c0_61] : memref<8x8x128xf32, #tpu.memory_space<vmem>>, vector<1x8x128xf32>
    %164 = vector.shape_cast %163 : vector<1x8x128xf32> to vector<8x128xf32>
    %165 = vector.shape_cast %161 : vector<8x128xf32> to vector<1x8x128xf32>
    tpu.vector_store %arg6[%162, %c0_60, %c0_61], %165 {strides = array<i32>} : memref<8x8x128xf32, #tpu.memory_space<vmem>>, vector<1x8x128xf32>,
    %c4_i32 = arith.constant 4 : i32
    %166 = arith.index_cast %c4_i32 : i32 to index
    %c0_62 = arith.constant 0 : index
    %c0_63 = arith.constant 0 : index
    %167 = vector.load %arg2[%166, %c0_62, %c0_63] : memref<8x8x512xf32, #tpu.memory_space<vmem>>, vector<1x8x512xf32>
    %168 = vector.shape_cast %167 : vector<1x8x512xf32> to vector<8x512xf32>
    %cst_64 = arith.constant dense<0.000000e+00> : vector<8x512xf32>
    %169 = tpu.matmul %161, %3, %cst_64 {dimension_numbers = #tpu.dot_dimension_numbers<[1], [0], [0], [1], [0, 0, 1, 1], [], []>} : vector<8x128xf32>, vector<128x512xf32>, vector<8x512xf32> -> vector<8x512xf32>
    %170 = arith.addf %168, %169 : vector<8x512xf32>
    %171 = vector.extract_strided_slice %170 {offsets = [0, 0], sizes = [8, 128], strides = [1, 1]} : vector<8x512xf32> to vector<8x128xf32>
    %cst_65 = arith.constant 5.000000e-01 : f32
    %172 = vector.broadcast %cst_65 : f32 to vector<8x128xf32>
    %173 = arith.mulf %172, %171 : vector<8x128xf32>
    %174 = math.tanh %173 : vector<8x128xf32>
    %cst_66 = arith.constant 1.000000e+00 : f32
    %175 = vector.broadcast %cst_66 : f32 to vector<8x128xf32>
    %176 = arith.addf %174, %175 : vector<8x128xf32>
    %cst_67 = arith.constant 5.000000e-01 : f32
    %177 = vector.broadcast %cst_67 : f32 to vector<8x128xf32>
    %178 = arith.mulf %177, %176 : vector<8x128xf32>
    %179 = vector.extract_strided_slice %170 {offsets = [0, 128], sizes = [8, 128], strides = [1, 1]} : vector<8x512xf32> to vector<8x128xf32>
    %cst_68 = arith.constant 5.000000e-01 : f32
    %180 = vector.broadcast %cst_68 : f32 to vector<8x128xf32>
    %181 = arith.mulf %180, %179 : vector<8x128xf32>
    %182 = math.tanh %181 : vector<8x128xf32>
    %cst_69 = arith.constant 1.000000e+00 : f32
    %183 = vector.broadcast %cst_69 : f32 to vector<8x128xf32>
    %184 = arith.addf %182, %183 : vector<8x128xf32>
    %cst_70 = arith.constant 5.000000e-01 : f32
    %185 = vector.broadcast %cst_70 : f32 to vector<8x128xf32>
    %186 = arith.mulf %185, %184 : vector<8x128xf32>
    %187 = vector.extract_strided_slice %170 {offsets = [0, 256], sizes = [8, 128], strides = [1, 1]} : vector<8x512xf32> to vector<8x128xf32>
    %188 = math.tanh %187 : vector<8x128xf32>
    %189 = arith.mulf %186, %151 : vector<8x128xf32>
    %190 = arith.mulf %178, %188 : vector<8x128xf32>
    %191 = arith.addf %189, %190 : vector<8x128xf32>
    %192 = vector.extract_strided_slice %170 {offsets = [0, 384], sizes = [8, 128], strides = [1, 1]} : vector<8x512xf32> to vector<8x128xf32>
    %cst_71 = arith.constant 5.000000e-01 : f32
    %193 = vector.broadcast %cst_71 : f32 to vector<8x128xf32>
    %194 = arith.mulf %193, %192 : vector<8x128xf32>
    %195 = math.tanh %194 : vector<8x128xf32>
    %cst_72 = arith.constant 1.000000e+00 : f32
    %196 = vector.broadcast %cst_72 : f32 to vector<8x128xf32>
    %197 = arith.addf %195, %196 : vector<8x128xf32>
    %cst_73 = arith.constant 5.000000e-01 : f32
    %198 = vector.broadcast %cst_73 : f32 to vector<8x128xf32>
    %199 = arith.mulf %198, %197 : vector<8x128xf32>
    %200 = math.tanh %191 : vector<8x128xf32>
    %201 = arith.mulf %199, %200 : vector<8x128xf32>
    %202 = arith.index_cast %c4_i32 : i32 to index
    %c0_74 = arith.constant 0 : index
    %c0_75 = arith.constant 0 : index
    %203 = vector.load %arg6[%202, %c0_74, %c0_75] : memref<8x8x128xf32, #tpu.memory_space<vmem>>, vector<1x8x128xf32>
    %204 = vector.shape_cast %203 : vector<1x8x128xf32> to vector<8x128xf32>
    %205 = vector.shape_cast %201 : vector<8x128xf32> to vector<1x8x128xf32>
    tpu.vector_store %arg6[%202, %c0_74, %c0_75], %205 {strides = array<i32>} : memref<8x8x128xf32, #tpu.memory_space<vmem>>, vector<1x8x128xf32>,
    %c5_i32 = arith.constant 5 : i32
    %206 = arith.index_cast %c5_i32 : i32 to index
    %c0_76 = arith.constant 0 : index
    %c0_77 = arith.constant 0 : index
    %207 = vector.load %arg2[%206, %c0_76, %c0_77] : memref<8x8x512xf32, #tpu.memory_space<vmem>>, vector<1x8x512xf32>
    %208 = vector.shape_cast %207 : vector<1x8x512xf32> to vector<8x512xf32>
    %cst_78 = arith.constant dense<0.000000e+00> : vector<8x512xf32>
    %209 = tpu.matmul %201, %3, %cst_78 {dimension_numbers = #tpu.dot_dimension_numbers<[1], [0], [0], [1], [0, 0, 1, 1], [], []>} : vector<8x128xf32>, vector<128x512xf32>, vector<8x512xf32> -> vector<8x512xf32>
    %210 = arith.addf %208, %209 : vector<8x512xf32>
    %211 = vector.extract_strided_slice %210 {offsets = [0, 0], sizes = [8, 128], strides = [1, 1]} : vector<8x512xf32> to vector<8x128xf32>
    %cst_79 = arith.constant 5.000000e-01 : f32
    %212 = vector.broadcast %cst_79 : f32 to vector<8x128xf32>
    %213 = arith.mulf %212, %211 : vector<8x128xf32>
    %214 = math.tanh %213 : vector<8x128xf32>
    %cst_80 = arith.constant 1.000000e+00 : f32
    %215 = vector.broadcast %cst_80 : f32 to vector<8x128xf32>
    %216 = arith.addf %214, %215 : vector<8x128xf32>
    %cst_81 = arith.constant 5.000000e-01 : f32
    %217 = vector.broadcast %cst_81 : f32 to vector<8x128xf32>
    %218 = arith.mulf %217, %216 : vector<8x128xf32>
    %219 = vector.extract_strided_slice %210 {offsets = [0, 128], sizes = [8, 128], strides = [1, 1]} : vector<8x512xf32> to vector<8x128xf32>
    %cst_82 = arith.constant 5.000000e-01 : f32
    %220 = vector.broadcast %cst_82 : f32 to vector<8x128xf32>
    %221 = arith.mulf %220, %219 : vector<8x128xf32>
    %222 = math.tanh %221 : vector<8x128xf32>
    %cst_83 = arith.constant 1.000000e+00 : f32
    %223 = vector.broadcast %cst_83 : f32 to vector<8x128xf32>
    %224 = arith.addf %222, %223 : vector<8x128xf32>
    %cst_84 = arith.constant 5.000000e-01 : f32
    %225 = vector.broadcast %cst_84 : f32 to vector<8x128xf32>
    %226 = arith.mulf %225, %224 : vector<8x128xf32>
    %227 = vector.extract_strided_slice %210 {offsets = [0, 256], sizes = [8, 128], strides = [1, 1]} : vector<8x512xf32> to vector<8x128xf32>
    %228 = math.tanh %227 : vector<8x128xf32>
    %229 = arith.mulf %226, %191 : vector<8x128xf32>
    %230 = arith.mulf %218, %228 : vector<8x128xf32>
    %231 = arith.addf %229, %230 : vector<8x128xf32>
    %232 = vector.extract_strided_slice %210 {offsets = [0, 384], sizes = [8, 128], strides = [1, 1]} : vector<8x512xf32> to vector<8x128xf32>
    %cst_85 = arith.constant 5.000000e-01 : f32
    %233 = vector.broadcast %cst_85 : f32 to vector<8x128xf32>
    %234 = arith.mulf %233, %232 : vector<8x128xf32>
    %235 = math.tanh %234 : vector<8x128xf32>
    %cst_86 = arith.constant 1.000000e+00 : f32
    %236 = vector.broadcast %cst_86 : f32 to vector<8x128xf32>
    %237 = arith.addf %235, %236 : vector<8x128xf32>
    %cst_87 = arith.constant 5.000000e-01 : f32
    %238 = vector.broadcast %cst_87 : f32 to vector<8x128xf32>
    %239 = arith.mulf %238, %237 : vector<8x128xf32>
    %240 = math.tanh %231 : vector<8x128xf32>
    %241 = arith.mulf %239, %240 : vector<8x128xf32>
    %242 = arith.index_cast %c5_i32 : i32 to index
    %c0_88 = arith.constant 0 : index
    %c0_89 = arith.constant 0 : index
    %243 = vector.load %arg6[%242, %c0_88, %c0_89] : memref<8x8x128xf32, #tpu.memory_space<vmem>>, vector<1x8x128xf32>
    %244 = vector.shape_cast %243 : vector<1x8x128xf32> to vector<8x128xf32>
    %245 = vector.shape_cast %241 : vector<8x128xf32> to vector<1x8x128xf32>
    tpu.vector_store %arg6[%242, %c0_88, %c0_89], %245 {strides = array<i32>} : memref<8x8x128xf32, #tpu.memory_space<vmem>>, vector<1x8x128xf32>,
    %c6_i32 = arith.constant 6 : i32
    %246 = arith.index_cast %c6_i32 : i32 to index
    %c0_90 = arith.constant 0 : index
    %c0_91 = arith.constant 0 : index
    %247 = vector.load %arg2[%246, %c0_90, %c0_91] : memref<8x8x512xf32, #tpu.memory_space<vmem>>, vector<1x8x512xf32>
    %248 = vector.shape_cast %247 : vector<1x8x512xf32> to vector<8x512xf32>
    %cst_92 = arith.constant dense<0.000000e+00> : vector<8x512xf32>
    %249 = tpu.matmul %241, %3, %cst_92 {dimension_numbers = #tpu.dot_dimension_numbers<[1], [0], [0], [1], [0, 0, 1, 1], [], []>} : vector<8x128xf32>, vector<128x512xf32>, vector<8x512xf32> -> vector<8x512xf32>
    %250 = arith.addf %248, %249 : vector<8x512xf32>
    %251 = vector.extract_strided_slice %250 {offsets = [0, 0], sizes = [8, 128], strides = [1, 1]} : vector<8x512xf32> to vector<8x128xf32>
    %cst_93 = arith.constant 5.000000e-01 : f32
    %252 = vector.broadcast %cst_93 : f32 to vector<8x128xf32>
    %253 = arith.mulf %252, %251 : vector<8x128xf32>
    %254 = math.tanh %253 : vector<8x128xf32>
    %cst_94 = arith.constant 1.000000e+00 : f32
    %255 = vector.broadcast %cst_94 : f32 to vector<8x128xf32>
    %256 = arith.addf %254, %255 : vector<8x128xf32>
    %cst_95 = arith.constant 5.000000e-01 : f32
    %257 = vector.broadcast %cst_95 : f32 to vector<8x128xf32>
    %258 = arith.mulf %257, %256 : vector<8x128xf32>
    %259 = vector.extract_strided_slice %250 {offsets = [0, 128], sizes = [8, 128], strides = [1, 1]} : vector<8x512xf32> to vector<8x128xf32>
    %cst_96 = arith.constant 5.000000e-01 : f32
    %260 = vector.broadcast %cst_96 : f32 to vector<8x128xf32>
    %261 = arith.mulf %260, %259 : vector<8x128xf32>
    %262 = math.tanh %261 : vector<8x128xf32>
    %cst_97 = arith.constant 1.000000e+00 : f32
    %263 = vector.broadcast %cst_97 : f32 to vector<8x128xf32>
    %264 = arith.addf %262, %263 : vector<8x128xf32>
    %cst_98 = arith.constant 5.000000e-01 : f32
    %265 = vector.broadcast %cst_98 : f32 to vector<8x128xf32>
    %266 = arith.mulf %265, %264 : vector<8x128xf32>
    %267 = vector.extract_strided_slice %250 {offsets = [0, 256], sizes = [8, 128], strides = [1, 1]} : vector<8x512xf32> to vector<8x128xf32>
    %268 = math.tanh %267 : vector<8x128xf32>
    %269 = arith.mulf %266, %231 : vector<8x128xf32>
    %270 = arith.mulf %258, %268 : vector<8x128xf32>
    %271 = arith.addf %269, %270 : vector<8x128xf32>
    %272 = vector.extract_strided_slice %250 {offsets = [0, 384], sizes = [8, 128], strides = [1, 1]} : vector<8x512xf32> to vector<8x128xf32>
    %cst_99 = arith.constant 5.000000e-01 : f32
    %273 = vector.broadcast %cst_99 : f32 to vector<8x128xf32>
    %274 = arith.mulf %273, %272 : vector<8x128xf32>
    %275 = math.tanh %274 : vector<8x128xf32>
    %cst_100 = arith.constant 1.000000e+00 : f32
    %276 = vector.broadcast %cst_100 : f32 to vector<8x128xf32>
    %277 = arith.addf %275, %276 : vector<8x128xf32>
    %cst_101 = arith.constant 5.000000e-01 : f32
    %278 = vector.broadcast %cst_101 : f32 to vector<8x128xf32>
    %279 = arith.mulf %278, %277 : vector<8x128xf32>
    %280 = math.tanh %271 : vector<8x128xf32>
    %281 = arith.mulf %279, %280 : vector<8x128xf32>
    %282 = arith.index_cast %c6_i32 : i32 to index
    %c0_102 = arith.constant 0 : index
    %c0_103 = arith.constant 0 : index
    %283 = vector.load %arg6[%282, %c0_102, %c0_103] : memref<8x8x128xf32, #tpu.memory_space<vmem>>, vector<1x8x128xf32>
    %284 = vector.shape_cast %283 : vector<1x8x128xf32> to vector<8x128xf32>
    %285 = vector.shape_cast %281 : vector<8x128xf32> to vector<1x8x128xf32>
    tpu.vector_store %arg6[%282, %c0_102, %c0_103], %285 {strides = array<i32>} : memref<8x8x128xf32, #tpu.memory_space<vmem>>, vector<1x8x128xf32>,
    %c7_i32 = arith.constant 7 : i32
    %286 = arith.index_cast %c7_i32 : i32 to index
    %c0_104 = arith.constant 0 : index
    %c0_105 = arith.constant 0 : index
    %287 = vector.load %arg2[%286, %c0_104, %c0_105] : memref<8x8x512xf32, #tpu.memory_space<vmem>>, vector<1x8x512xf32>
    %288 = vector.shape_cast %287 : vector<1x8x512xf32> to vector<8x512xf32>
    %cst_106 = arith.constant dense<0.000000e+00> : vector<8x512xf32>
    %289 = tpu.matmul %281, %3, %cst_106 {dimension_numbers = #tpu.dot_dimension_numbers<[1], [0], [0], [1], [0, 0, 1, 1], [], []>} : vector<8x128xf32>, vector<128x512xf32>, vector<8x512xf32> -> vector<8x512xf32>
    %290 = arith.addf %288, %289 : vector<8x512xf32>
    %291 = vector.extract_strided_slice %290 {offsets = [0, 0], sizes = [8, 128], strides = [1, 1]} : vector<8x512xf32> to vector<8x128xf32>
    %cst_107 = arith.constant 5.000000e-01 : f32
    %292 = vector.broadcast %cst_107 : f32 to vector<8x128xf32>
    %293 = arith.mulf %292, %291 : vector<8x128xf32>
    %294 = math.tanh %293 : vector<8x128xf32>
    %cst_108 = arith.constant 1.000000e+00 : f32
    %295 = vector.broadcast %cst_108 : f32 to vector<8x128xf32>
    %296 = arith.addf %294, %295 : vector<8x128xf32>
    %cst_109 = arith.constant 5.000000e-01 : f32
    %297 = vector.broadcast %cst_109 : f32 to vector<8x128xf32>
    %298 = arith.mulf %297, %296 : vector<8x128xf32>
    %299 = vector.extract_strided_slice %290 {offsets = [0, 128], sizes = [8, 128], strides = [1, 1]} : vector<8x512xf32> to vector<8x128xf32>
    %cst_110 = arith.constant 5.000000e-01 : f32
    %300 = vector.broadcast %cst_110 : f32 to vector<8x128xf32>
    %301 = arith.mulf %300, %299 : vector<8x128xf32>
    %302 = math.tanh %301 : vector<8x128xf32>
    %cst_111 = arith.constant 1.000000e+00 : f32
    %303 = vector.broadcast %cst_111 : f32 to vector<8x128xf32>
    %304 = arith.addf %302, %303 : vector<8x128xf32>
    %cst_112 = arith.constant 5.000000e-01 : f32
    %305 = vector.broadcast %cst_112 : f32 to vector<8x128xf32>
    %306 = arith.mulf %305, %304 : vector<8x128xf32>
    %307 = vector.extract_strided_slice %290 {offsets = [0, 256], sizes = [8, 128], strides = [1, 1]} : vector<8x512xf32> to vector<8x128xf32>
    %308 = math.tanh %307 : vector<8x128xf32>
    %309 = arith.mulf %306, %271 : vector<8x128xf32>
    %310 = arith.mulf %298, %308 : vector<8x128xf32>
    %311 = arith.addf %309, %310 : vector<8x128xf32>
    %312 = vector.extract_strided_slice %290 {offsets = [0, 384], sizes = [8, 128], strides = [1, 1]} : vector<8x512xf32> to vector<8x128xf32>
    %cst_113 = arith.constant 5.000000e-01 : f32
    %313 = vector.broadcast %cst_113 : f32 to vector<8x128xf32>
    %314 = arith.mulf %313, %312 : vector<8x128xf32>
    %315 = math.tanh %314 : vector<8x128xf32>
    %cst_114 = arith.constant 1.000000e+00 : f32
    %316 = vector.broadcast %cst_114 : f32 to vector<8x128xf32>
    %317 = arith.addf %315, %316 : vector<8x128xf32>
    %cst_115 = arith.constant 5.000000e-01 : f32
    %318 = vector.broadcast %cst_115 : f32 to vector<8x128xf32>
    %319 = arith.mulf %318, %317 : vector<8x128xf32>
    %320 = math.tanh %311 : vector<8x128xf32>
    %321 = arith.mulf %319, %320 : vector<8x128xf32>
    %322 = arith.index_cast %c7_i32 : i32 to index
    %c0_116 = arith.constant 0 : index
    %c0_117 = arith.constant 0 : index
    %323 = vector.load %arg6[%322, %c0_116, %c0_117] : memref<8x8x128xf32, #tpu.memory_space<vmem>>, vector<1x8x128xf32>
    %324 = vector.shape_cast %323 : vector<1x8x128xf32> to vector<8x128xf32>
    %325 = vector.shape_cast %321 : vector<8x128xf32> to vector<1x8x128xf32>
    tpu.vector_store %arg6[%322, %c0_116, %c0_117], %325 {strides = array<i32>} : memref<8x8x128xf32, #tpu.memory_space<vmem>>, vector<1x8x128xf32>,
    %c8_i32 = arith.constant 8 : i32
    %c0_118 = arith.constant 0 : index
    %c0_119 = arith.constant 0 : index
    %326 = vector.load %arg8[%c0_118, %c0_119] : memref<8x128xf32, #tpu.memory_space<vmem>>, vector<8x128xf32>
    tpu.vector_store %arg8[%c0_118, %c0_119], %321 {strides = array<i32>} : memref<8x128xf32, #tpu.memory_space<vmem>>, vector<8x128xf32>,
    %c0_120 = arith.constant 0 : index
    %c0_121 = arith.constant 0 : index
    %327 = vector.load %arg9[%c0_120, %c0_121] : memref<8x128xf32, #tpu.memory_space<vmem>>, vector<8x128xf32>
    tpu.vector_store %arg9[%c0_120, %c0_121], %311 {strides = array<i32>} : memref<8x128xf32, #tpu.memory_space<vmem>>, vector<8x128xf32>,
    %c0_i32_122 = arith.constant 0 : i32
    %328 = arith.cmpi eq, %arg1, %c0_i32_122 : i32
    %329 = arith.extui %328 : i1 to i32
    %c0_i32_123 = arith.constant 0 : i32
    %330 = arith.cmpi ne, %329, %c0_i32_123 : i32
    scf.if %330 {
      %c0_124 = arith.constant 0 : index
      %c0_125 = arith.constant 0 : index
      %331 = vector.load %arg7[%c0_124, %c0_125] : memref<8x128xf32, #tpu.memory_space<vmem>>, vector<8x128xf32>
      tpu.vector_store %arg7[%c0_124, %c0_125], %311 {strides = array<i32>} : memref<8x128xf32, #tpu.memory_space<vmem>>, vector<8x128xf32>,
    } else {
    }
    return
  }
  func.func @transform_0(%arg0: i32, %arg1: i32) -> (i32, i32, i32) {
    %c0_i32 = arith.constant 0 : i32
    %c0_i32_0 = arith.constant 0 : i32
    return %arg1, %arg0, %c0_i32 : i32, i32, i32
  }
  func.func @transform_1(%arg0: i32, %arg1: i32) -> (i32, i32) {
    %c0_i32 = arith.constant 0 : i32
    %c0_i32_0 = arith.constant 0 : i32
    %c0_i32_1 = arith.constant 0 : i32
    return %c0_i32, %c0_i32_0 : i32, i32
  }
  func.func @transform_2(%arg0: i32, %arg1: i32) -> (i32, i32) {
    %c0_i32 = arith.constant 0 : i32
    %c0_i32_0 = arith.constant 0 : i32
    return %arg0, %c0_i32 : i32, i32
  }
  func.func @transform_3(%arg0: i32, %arg1: i32) -> (i32, i32) {
    %c0_i32 = arith.constant 0 : i32
    %c0_i32_0 = arith.constant 0 : i32
    return %arg0, %c0_i32 : i32, i32
  }
  func.func @transform_4(%arg0: i32, %arg1: i32) -> (i32, i32, i32) {
    %c0_i32 = arith.constant 0 : i32
    %c0_i32_0 = arith.constant 0 : i32
    return %arg1, %arg0, %c0_i32 : i32, i32, i32
  }
  func.func @transform_5(%arg0: i32, %arg1: i32) -> (i32, i32) {
    %c0_i32 = arith.constant 0 : i32
    %c0_i32_0 = arith.constant 0 : i32
    return %arg0, %c0_i32 : i32, i32
  }
}

</mosaic_0001>

<llo_original>
// kernel: tpu_custom_call.1
$region0: #{tpu_custom_call.1}
  #allocation0 [shape = 'u32[]', space=smem, size = 0x4, offset = 0x4, fixed_abs, tag = 'smem constant byte address 0x4 - core index']
  #allocation1 [shape = 'u32[144,128]{1,0:T(1,128)}', space=vmem, size = 0x12000, scoped, tag = 'internal scratch']
  #allocation2 [shape = 'f32[8,128]{1,0:T(8,128)}', space=vmem, size = 0x1000, scoped, tag = 'scratch operand']
  #allocation3 [shape = 'f32[8,128]{1,0:T(8,128)}', space=vmem, size = 0x1000, scoped, tag = 'scratch operand']
  %s0 = inlined_call_operand.hbm [shape: f32[8,8,512], index: 0, kind: input, shape index: {}]
  %s1 = inlined_call_operand.hbm [shape: f32[128,512], index: 1, kind: input, shape index: {}]
  %s2 = inlined_call_operand.hbm [shape: f32[8,128], index: 2, kind: input, shape index: {}]
  %s3 = inlined_call_operand.vmem [shape: f32[8,128], index: 3, kind: input, shape index: {}]
  %s4 = inlined_call_operand.hbm [shape: f32[8,8,128], index: 4, kind: output, shape index: {0}]
  %s5 = inlined_call_operand.hbm [shape: f32[8,128], index: 5, kind: output, shape index: {1}]
  %6 = xla_tuple %s4, %s5
  %s7 = sld [smem:[#allocation0]]
  $region54: #{tpu_custom_call.1} parent=0
    _
  %s9 = ssub.s32 1, %s7
  %s10 = scalar_select 0, %s9, %s7
  $region1: #{tpu_custom_call.1} parent=0
    #allocation4 [shape = 'u8[131072]{0}', space=vmem, size = 0x20000, scoped, tag = 'input window, operand 0, single buffered']
    #allocation5 [shape = 's32[1]{0}', space=sflag, size = 0x4, scoped, tag = 'scoped memory for tpu_custom_call.1']
    #allocation6 [shape = 's32[1]{0}', space=sflag, size = 0x4, scoped, tag = 'scoped memory for tpu_custom_call.1']
    #allocation7 [shape = 'u8[262144]{0}', space=vmem, size = 0x40000, scoped, tag = 'input window, operand 1, single buffered']
    #allocation8 [shape = 's32[1]{0}', space=sflag, size = 0x4, scoped, tag = 'scoped memory for tpu_custom_call.1']
    #allocation9 [shape = 'u8[4096]{0}', space=vmem, size = 0x1000, scoped, tag = 'input window, operand 2, single buffered']
    #allocation10 [shape = 'u8[32768]{0}', space=vmem, size = 0x8000, scoped, tag = 'output window, operand 0, single buffered']
    #allocation11 [shape = 'u8[4096]{0}', space=vmem, size = 0x1000, scoped, tag = 'output window, operand 1, single buffered']
    #allocation12 [shape = 's32[1]{0}', space=sflag, size = 0x4, scoped, tag = 'scoped memory for tpu_custom_call.1']
    %11 = vsyncpa [#allocation5], 0
    %12 = vsyncpa [#allocation8], 0
    %13 = vsyncpa [#allocation6], 0
    %14 = vsyncpa [#allocation12], 0
    // Predicated region
    $region2: #{tpu_custom_call.1} parent=1 // pred_check
      _
    $region3: #{tpu_custom_call.1} parent=1 // pred_check_branch
      %16 = sbr.rel (0) target = $region5
    $region4: #{tpu_custom_call.1} parent=1 // pred_region
      %s18 = ssub.s32 4096, 4096
      %19 = vsyncadd [#allocation5], %s18
      %s20 = sshll.u32 [#allocation4], 4
      %s21 = int_to_ptr.vmem [resolvable:$true] %s20
      %26 = dma.hbm_to_vmem [thread:$0]  %s0, 4096, %s21, [#allocation5], 512, 512, 32
    $region5: #{tpu_custom_call.1} parent=1 // pred_fallthru
      _
    // Predicated region
    $region6: #{tpu_custom_call.1} parent=1 // pred_check
      _
    $region7: #{tpu_custom_call.1} parent=1 // pred_check_branch
      %28 = sbr.rel (0) target = $region9
    $region8: #{tpu_custom_call.1} parent=1 // pred_region
      %s30 = ssub.s32 8192, 8192
      %31 = vsyncadd [#allocation8], %s30
      %s32 = sshll.u32 [#allocation7], 4
      %s33 = int_to_ptr.vmem [resolvable:$true] %s32
      %38 = dma.hbm_to_vmem [thread:$0]  %s1, 8192, %s33, [#allocation8], 512, 512, 32
    $region9: #{tpu_custom_call.1} parent=1 // pred_fallthru
      _
    // Predicated region
    $region10: #{tpu_custom_call.1} parent=1 // pred_check
      _
    $region11: #{tpu_custom_call.1} parent=1 // pred_check_branch
      %40 = sbr.rel (0) target = $region13
    $region12: #{tpu_custom_call.1} parent=1 // pred_region
      %s42 = ssub.s32 128, 128
      %43 = vsyncadd [#allocation8], %s42
      %s45 = sshll.u32 [#allocation9], 4
      %s46 = int_to_ptr.vmem [resolvable:$true] %s45
      %48 = dma.hbm_to_vmem [thread:$0]  %s2, 128, %s46, [#allocation8]
    $region13: #{tpu_custom_call.1} parent=1 // pred_fallthru
      _
    // Predicated region
    $region14: #{tpu_custom_call.1} parent=1 // pred_check
      _
    $region15: #{tpu_custom_call.1} parent=1 // pred_check_branch
      %50 = sbr.rel (0) target = $region17
    $region16: #{tpu_custom_call.1} parent=1 // pred_region
      _
    $region17: #{tpu_custom_call.1} parent=1 // pred_fallthru
      _
    // Predicated region
    $region18: #{tpu_custom_call.1} parent=1 // pred_check
      _
    $region19: #{tpu_custom_call.1} parent=1 // pred_check_branch
      %52 = sbr.rel (0) target = $region21
    $region20: #{tpu_custom_call.1} parent=1 // pred_region
      %53 = dma.done [#allocation5], 4096
    $region21: #{tpu_custom_call.1} parent=1 // pred_fallthru
      _
    // Predicated region
    $region22: #{tpu_custom_call.1} parent=1 // pred_check
      _
    $region23: #{tpu_custom_call.1} parent=1 // pred_check_branch
      %55 = sbr.rel (0) target = $region25
    $region24: #{tpu_custom_call.1} parent=1 // pred_region
      %56 = dma.done [#allocation8], 8192
    $region25: #{tpu_custom_call.1} parent=1 // pred_fallthru
      _
    // Predicated region
    $region26: #{tpu_custom_call.1} parent=1 // pred_check
      _
    $region27: #{tpu_custom_call.1} parent=1 // pred_check_branch
      %58 = sbr.rel (0) target = $region29
    $region28: #{tpu_custom_call.1} parent=1 // pred_region
      %59 = dma.done [#allocation8], 128
    $region29: #{tpu_custom_call.1} parent=1 // pred_fallthru
      _
    %p60 = scmp.eq.s32.totalorder 0, 0
    // Predicated region
    $region30: #{tpu_custom_call.1} parent=1 // pred_check
      %p61 = pneg %p60
    $region31: #{tpu_custom_call.1} parent=1 // pred_check_branch
      %63 = sbr.rel (%p61) target = $region33
    $region32: #{tpu_custom_call.1} parent=1 // pred_region
      %v64 = vld [vmem:[#allocation9] sm:$0xff]
      %65 = vst [vmem:[#allocation2] sm:$0xff] %v64
      %v66 = vld [vmem:[%s3] sm:$0xff]
      %67 = vst [vmem:[#allocation3] sm:$0xff] %v66
    $region33: #{tpu_custom_call.1} parent=1 // pred_fallthru
      _
    %v68 = vld [vmem:[#allocation7] sm:$0xff]
    %v69 = vld [vmem:[#allocation7 + $0x8] sm:$0xff]
    %v70 = vld [vmem:[#allocation7 + $0x10] sm:$0xff]
    %v71 = vld [vmem:[#allocation7 + $0x18] sm:$0xff]
    %v72 = vld [vmem:[#allocation7 + $0x20] sm:$0xff]
    %v73 = vld [vmem:[#allocation7 + $0x28] sm:$0xff]
    %v74 = vld [vmem:[#allocation7 + $0x30] sm:$0xff]
    %v75 = vld [vmem:[#allocation7 + $0x38] sm:$0xff]
    %v76 = vld [vmem:[#allocation7 + $0x40] sm:$0xff]
    %v77 = vld [vmem:[#allocation7 + $0x48] sm:$0xff]
    %v78 = vld [vmem:[#allocation7 + $0x50] sm:$0xff]
    %v79 = vld [vmem:[#allocation7 + $0x58] sm:$0xff]
    %v80 = vld [vmem:[#allocation7 + $0x60] sm:$0xff]
    %v81 = vld [vmem:[#allocation7 + $0x68] sm:$0xff]
    %v82 = vld [vmem:[#allocation7 + $0x70] sm:$0xff]
    %v83 = vld [vmem:[#allocation7 + $0x78] sm:$0xff]
    %v84 = vld [vmem:[#allocation7 + $0x80] sm:$0xff]
    %v85 = vld [vmem:[#allocation7 + $0x88] sm:$0xff]
    %v86 = vld [vmem:[#allocation7 + $0x90] sm:$0xff]
    %v87 = vld [vmem:[#allocation7 + $0x98] sm:$0xff]
    %v88 = vld [vmem:[#allocation7 + $0xa0] sm:$0xff]
    %v89 = vld [vmem:[#allocation7 + $0xa8] sm:$0xff]
    %v90 = vld [vmem:[#allocation7 + $0xb0] sm:$0xff]
    %v91 = vld [vmem:[#allocation7 + $0xb8] sm:$0xff]
    %v92 = vld [vmem:[#allocation7 + $0xc0] sm:$0xff]
    %v93 = vld [vmem:[#allocation7 + $0xc8] sm:$0xff]
    %v94 = vld [vmem:[#allocation7 + $0xd0] sm:$0xff]
    %v95 = vld [vmem:[#allocation7 + $0xd8] sm:$0xff]
    %v96 = vld [vmem:[#allocation7 + $0xe0] sm:$0xff]
    %v97 = vld [vmem:[#allocation7 + $0xe8] sm:$0xff]
    %v98 = vld [vmem:[#allocation7 + $0xf0] sm:$0xff]
    %v99 = vld [vmem:[#allocation7 + $0xf8] sm:$0xff]
    %v100 = vld [vmem:[#allocation7 + $0x100] sm:$0xff]
    %v101 = vld [vmem:[#allocation7 + $0x108] sm:$0xff]
    %v102 = vld [vmem:[#allocation7 + $0x110] sm:$0xff]
    %v103 = vld [vmem:[#allocation7 + $0x118] sm:$0xff]
    %v104 = vld [vmem:[#allocation7 + $0x120] sm:$0xff]
    %v105 = vld [vmem:[#allocation7 + $0x128] sm:$0xff]
    %v106 = vld [vmem:[#allocation7 + $0x130] sm:$0xff]
    %v107 = vld [vmem:[#allocation7 + $0x138] sm:$0xff]
    %v108 = vld [vmem:[#allocation7 + $0x140] sm:$0xff]
    %v109 = vld [vmem:[#allocation7 + $0x148] sm:$0xff]
    %v110 = vld [vmem:[#allocation7 + $0x150] sm:$0xff]
    %v111 = vld [vmem:[#allocation7 + $0x158] sm:$0xff]
    %v112 = vld [vmem:[#allocation7 + $0x160] sm:$0xff]
    %v113 = vld [vmem:[#allocation7 + $0x168] sm:$0xff]
    %v114 = vld [vmem:[#allocation7 + $0x170] sm:$0xff]
    %v115 = vld [vmem:[#allocation7 + $0x178] sm:$0xff]
    %v116 = vld [vmem:[#allocation7 + $0x180] sm:$0xff]
    %v117 = vld [vmem:[#allocation7 + $0x188] sm:$0xff]
    %v118 = vld [vmem:[#allocation7 + $0x190] sm:$0xff]
    %v119 = vld [vmem:[#allocation7 + $0x198] sm:$0xff]
    %v120 = vld [vmem:[#allocation7 + $0x1a0] sm:$0xff]
    %v121 = vld [vmem:[#allocation7 + $0x1a8] sm:$0xff]
    %v122 = vld [vmem:[#allocation7 + $0x1b0] sm:$0xff]
    %v123 = vld [vmem:[#allocation7 + $0x1b8] sm:$0xff]
    %v124 = vld [vmem:[#allocation7 + $0x1c0] sm:$0xff]
    %v125 = vld [vmem:[#allocation7 + $0x1c8] sm:$0xff]
    %v126 = vld [vmem:[#allocation7 + $0x1d0] sm:$0xff]
    %v127 = vld [vmem:[#allocation7 + $0x1d8] sm:$0xff]
    %v128 = vld [vmem:[#allocation7 + $0x1e0] sm:$0xff]
    %v129 = vld [vmem:[#allocation7 + $0x1e8] sm:$0xff]
    %v130 = vld [vmem:[#allocation7 + $0x1f0] sm:$0xff]
    %v131 = vld [vmem:[#allocation7 + $0x1f8] sm:$0xff]
    %v132 = vld [vmem:[#allocation2] sm:$0xff]
    %v133 = vld [vmem:[#allocation3] sm:$0xff]
    %v134 = vld [vmem:[#allocation4] sm:$0xff]
    %v135 = vld [vmem:[#allocation4 + $0x8] sm:$0xff]
    %v136 = vld [vmem:[#allocation4 + $0x10] sm:$0xff]
    %v137 = vld [vmem:[#allocation4 + $0x18] sm:$0xff]
    %138 = vmatprep.subr.mxu0 %v69
    %139 = vmatpush1.msra.mxu0 %v68
    %140 = vmatprep.subr.mxu0 %v73
    %141 = vmatpush1.msra.mxu0 %v72
    %142 = vmatprep.subr.mxu0 %v77
    %143 = vmatpush1.msra.mxu0 %v76
    %144 = vmatprep.subr.mxu0 %v81
    %145 = vmatpush1.msra.mxu0 %v80
    %146 = vmatprep.subr.mxu0 %v85
    %147 = vmatpush1.msra.mxu0 %v84
    %148 = vmatprep.subr.mxu0 %v89
    %149 = vmatpush1.msra.mxu0 %v88
    %150 = vmatprep.subr.mxu0 %v93
    %151 = vmatpush1.msra.mxu0 %v92
    %152 = vmatprep.subr.mxu0 %v97
    %153 = vmatpush1.msra.mxu0 %v96
    %154 = vmatprep.subr.mxu0 %v101
    %155 = vmatpush1.msra.mxu0 %v100
    %156 = vmatprep.subr.mxu0 %v105
    %157 = vmatpush1.msra.mxu0 %v104
    %158 = vmatprep.subr.mxu0 %v109
    %159 = vmatpush1.msra.mxu0 %v108
    %160 = vmatprep.subr.mxu0 %v113
    %161 = vmatpush1.msra.mxu0 %v112
    %162 = vmatprep.subr.mxu0 %v117
    %163 = vmatpush1.msra.mxu0 %v116
    %164 = vmatprep.subr.mxu0 %v121
    %165 = vmatpush1.msra.mxu0 %v120
    %166 = vmatprep.subr.mxu0 %v125
    %167 = vmatpush1.msra.mxu0 %v124
    %168 = vmatprep.subr.mxu0 %v129
    %169 = vmatpush1.msra.mxu0 %v128
    %170 = vmatprep.subr.mxu0 0.0
    %171 = vmatpush1.msra.mxu0 0.0
    %172 = vmatprep.subr.mxu0 0.0
    %173 = vmatpush1.msra.mxu0 0.0
    %174 = vmatprep.subr.mxu0 0.0
    %175 = vmatpush1.msra.mxu0 0.0
    %176 = vmatprep.subr.mxu0 0.0
    %177 = vmatpush1.msra.mxu0 0.0
    %178 = vmatprep.subr.mxu0 0.0
    %179 = vmatpush1.msra.mxu0 0.0
    %180 = vmatprep.subr.mxu0 0.0
    %181 = vmatpush1.msra.mxu0 0.0
    %182 = vmatprep.subr.mxu0 0.0
    %183 = vmatpush1.msra.mxu0 0.0
    %184 = vmatprep.subr.mxu0 0.0
    %185 = vmatpush1.msra.mxu0 0.0
    %186 = vmatprep.subr.mxu0 0.0
    %187 = vmatpush1.msra.mxu0 0.0
    %188 = vmatprep.subr.mxu0 0.0
    %189 = vmatpush1.msra.mxu0 0.0
    %190 = vmatprep.subr.mxu0 0.0
    %191 = vmatpush1.msra.mxu0 0.0
    %192 = vmatprep.subr.mxu0 0.0
    %193 = vmatpush1.msra.mxu0 0.0
    %194 = vmatprep.subr.mxu0 0.0
    %195 = vmatpush1.msra.mxu0 0.0
    %196 = vmatprep.subr.mxu0 0.0
    %197 = vmatpush1.msra.mxu0 0.0
    %198 = vmatprep.subr.mxu0 0.0
    %199 = vmatpush1.msra.mxu0 0.0
    %200 = vmatprep.subr.mxu0 0.0
    %201 = vmatpush1.msra.mxu0 0.0
    %202 = vmatprep.mubr.f32.mxu0 0.0
    %203 = vmatmul.mubr.f32.gmra.mrb[0].mxu0 %v132
    %v204 = vpop.f32.mrb[0].mxu0
    %v205 = vadd.f32 0.0, %v204
    %v206 = vpop.f32.mrb[0].mxu0
    %v207 = vadd.f32 0.0, %v206
    %208 = vdwg.mxu0
    %209 = vmatprep.subr.mxu0 %v71
    %210 = vmatpush1.msra.mxu0 %v70
    %211 = vmatprep.subr.mxu0 %v75
    %212 = vmatpush1.msra.mxu0 %v74
    %213 = vmatprep.subr.mxu0 %v79
    %214 = vmatpush1.msra.mxu0 %v78
    %215 = vmatprep.subr.mxu0 %v83
    %216 = vmatpush1.msra.mxu0 %v82
    %217 = vmatprep.subr.mxu0 %v87
    %218 = vmatpush1.msra.mxu0 %v86
    %219 = vmatprep.subr.mxu0 %v91
    %220 = vmatpush1.msra.mxu0 %v90
    %221 = vmatprep.subr.mxu0 %v95
    %222 = vmatpush1.msra.mxu0 %v94
    %223 = vmatprep.subr.mxu0 %v99
    %224 = vmatpush1.msra.mxu0 %v98
    %225 = vmatprep.subr.mxu0 %v103
    %226 = vmatpush1.msra.mxu0 %v102
    %227 = vmatprep.subr.mxu0 %v107
    %228 = vmatpush1.msra.mxu0 %v106
    %229 = vmatprep.subr.mxu0 %v111
    %230 = vmatpush1.msra.mxu0 %v110
    %231 = vmatprep.subr.mxu0 %v115
    %232 = vmatpush1.msra.mxu0 %v114
    %233 = vmatprep.subr.mxu0 %v119
    %234 = vmatpush1.msra.mxu0 %v118
    %235 = vmatprep.subr.mxu0 %v123
    %236 = vmatpush1.msra.mxu0 %v122
    %237 = vmatprep.subr.mxu0 %v127
    %238 = vmatpush1.msra.mxu0 %v126
    %239 = vmatprep.subr.mxu0 %v131
    %240 = vmatpush1.msra.mxu0 %v130
    %241 = vmatprep.subr.mxu0 0.0
    %242 = vmatpush1.msra.mxu0 0.0
    %243 = vmatprep.subr.mxu0 0.0
    %244 = vmatpush1.msra.mxu0 0.0
    %245 = vmatprep.subr.mxu0 0.0
    %246 = vmatpush1.msra.mxu0 0.0
    %247 = vmatprep.subr.mxu0 0.0
    %248 = vmatpush1.msra.mxu0 0.0
    %249 = vmatprep.subr.mxu0 0.0
    %250 = vmatpush1.msra.mxu0 0.0
    %251 = vmatprep.subr.mxu0 0.0
    %252 = vmatpush1.msra.mxu0 0.0
    %253 = vmatprep.subr.mxu0 0.0
    %254 = vmatpush1.msra.mxu0 0.0
    %255 = vmatprep.subr.mxu0 0.0
    %256 = vmatpush1.msra.mxu0 0.0
    %257 = vmatprep.subr.mxu0 0.0
    %258 = vmatpush1.msra.mxu0 0.0
    %259 = vmatprep.subr.mxu0 0.0
    %260 = vmatpush1.msra.mxu0 0.0
    %261 = vmatprep.subr.mxu0 0.0
    %262 = vmatpush1.msra.mxu0 0.0
    %263 = vmatprep.subr.mxu0 0.0
    %264 = vmatpush1.msra.mxu0 0.0
    %265 = vmatprep.subr.mxu0 0.0
    %266 = vmatpush1.msra.mxu0 0.0
    %267 = vmatprep.subr.mxu0 0.0
    %268 = vmatpush1.msra.mxu0 0.0
    %269 = vmatprep.subr.mxu0 0.0
    %270 = vmatpush1.msra.mxu0 0.0
    %271 = vmatprep.subr.mxu0 0.0
    %272 = vmatpush1.msra.mxu0 0.0
    %273 = vmatprep.mubr.f32.mxu0 0.0
    %274 = vmatmul.mubr.f32.gmra.mrb[0].mxu0 %v132
    %v275 = vpop.f32.mrb[0].mxu0
    %v276 = vadd.f32 0.0, %v275
    %v277 = vpop.f32.mrb[0].mxu0
    %v278 = vadd.f32 0.0, %v277
    %279 = vdwg.mxu0
    %v280 = vadd.f32 %v134, %v205
    %v281 = vadd.f32 %v135, %v207
    %v282 = vadd.f32 %v136, %v276
    %v283 = vadd.f32 %v137, %v278
    %v284 = vmul.f32 %v280, 0.5
    %v285 = vtanh.pop %v284
    %v286 = vadd.f32 %v285, 1.0
    %v287 = vmul.f32 %v286, 0.5
    %v288 = vmul.f32 %v281, 0.5
    %v289 = vtanh.pop %v288
    %v290 = vadd.f32 %v289, 1.0
    %v291 = vmul.f32 %v290, 0.5
    %v292 = vtanh.pop %v282
    %v293 = vmul.f32 %v291, %v133
    %v294 = vmul.f32 %v287, %v292
    %v295 = vadd.f32 %v293, %v294
    %v296 = vmul.f32 %v283, 0.5
    %v297 = vtanh.pop %v296
    %v298 = vadd.f32 %v297, 1.0
    %v299 = vmul.f32 %v298, 0.5
    %v300 = vtanh.pop %v295
    %v301 = vmul.f32 %v299, %v300
    %302 = vst [vmem:[#allocation10] sm:$0xff] %v301
    %s303 = scalar_lea.vmem [#allocation4], 32
    %v304 = vld [vmem:[%s303] sm:$0xff]
    %v305 = vld [vmem:[%s303 + $0x8] sm:$0xff]
    %v306 = vld [vmem:[%s303 + $0x10] sm:$0xff]
    %v307 = vld [vmem:[%s303 + $0x18] sm:$0xff]
    %308 = vmatprep.subr.mxu0 %v69
    %309 = vmatpush1.msra.mxu0 %v68
    %310 = vmatprep.subr.mxu0 %v73
    %311 = vmatpush1.msra.mxu0 %v72
    %312 = vmatprep.subr.mxu0 %v77
    %313 = vmatpush1.msra.mxu0 %v76
    %314 = vmatprep.subr.mxu0 %v81
    %315 = vmatpush1.msra.mxu0 %v80
    %316 = vmatprep.subr.mxu0 %v85
    %317 = vmatpush1.msra.mxu0 %v84
    %318 = vmatprep.subr.mxu0 %v89
    %319 = vmatpush1.msra.mxu0 %v88
    %320 = vmatprep.subr.mxu0 %v93
    %321 = vmatpush1.msra.mxu0 %v92
    %322 = vmatprep.subr.mxu0 %v97
    %323 = vmatpush1.msra.mxu0 %v96
    %324 = vmatprep.subr.mxu0 %v101
    %325 = vmatpush1.msra.mxu0 %v100
    %326 = vmatprep.subr.mxu0 %v105
    %327 = vmatpush1.msra.mxu0 %v104
    %328 = vmatprep.subr.mxu0 %v109
    %329 = vmatpush1.msra.mxu0 %v108
    %330 = vmatprep.subr.mxu0 %v113
    %331 = vmatpush1.msra.mxu0 %v112
    %332 = vmatprep.subr.mxu0 %v117
    %333 = vmatpush1.msra.mxu0 %v116
    %334 = vmatprep.subr.mxu0 %v121
    %335 = vmatpush1.msra.mxu0 %v120
    %336 = vmatprep.subr.mxu0 %v125
    %337 = vmatpush1.msra.mxu0 %v124
    %338 = vmatprep.subr.mxu0 %v129
    %339 = vmatpush1.msra.mxu0 %v128
    %340 = vmatprep.subr.mxu0 0.0
    %341 = vmatpush1.msra.mxu0 0.0
    %342 = vmatprep.subr.mxu0 0.0
    %343 = vmatpush1.msra.mxu0 0.0
    %344 = vmatprep.subr.mxu0 0.0
    %345 = vmatpush1.msra.mxu0 0.0
    %346 = vmatprep.subr.mxu0 0.0
    %347 = vmatpush1.msra.mxu0 0.0
    %348 = vmatprep.subr.mxu0 0.0
    %349 = vmatpush1.msra.mxu0 0.0
    %350 = vmatprep.subr.mxu0 0.0
    %351 = vmatpush1.msra.mxu0 0.0
    %352 = vmatprep.subr.mxu0 0.0
    %353 = vmatpush1.msra.mxu0 0.0
    %354 = vmatprep.subr.mxu0 0.0
    %355 = vmatpush1.msra.mxu0 0.0
    %356 = vmatprep.subr.mxu0 0.0
    %357 = vmatpush1.msra.mxu0 0.0
    %358 = vmatprep.subr.mxu0 0.0
    %359 = vmatpush1.msra.mxu0 0.0
    %360 = vmatprep.subr.mxu0 0.0
    %361 = vmatpush1.msra.mxu0 0.0
    %362 = vmatprep.subr.mxu0 0.0
    %363 = vmatpush1.msra.mxu0 0.0
    %364 = vmatprep.subr.mxu0 0.0
    %365 = vmatpush1.msra.mxu0 0.0
    %366 = vmatprep.subr.mxu0 0.0
    %367 = vmatpush1.msra.mxu0 0.0
    %368 = vmatprep.subr.mxu0 0.0
    %369 = vmatpush1.msra.mxu0 0.0
    %370 = vmatprep.subr.mxu0 0.0
    %371 = vmatpush1.msra.mxu0 0.0
    %372 = vmatprep.mubr.f32.mxu0 0.0
    %373 = vmatmul.mubr.f32.gmra.mrb[0].mxu0 %v301
    %v374 = vpop.f32.mrb[0].mxu0
    %v375 = vadd.f32 0.0, %v374
    %v376 = vpop.f32.mrb[0].mxu0
    %v377 = vadd.f32 0.0, %v376
    %378 = vdwg.mxu0
    %379 = vmatprep.subr.mxu0 %v71
    %380 = vmatpush1.msra.mxu0 %v70
    %381 = vmatprep.subr.mxu0 %v75
    %382 = vmatpush1.msra.mxu0 %v74
    %383 = vmatprep.subr.mxu0 %v79
    %384 = vmatpush1.msra.mxu0 %v78
    %385 = vmatprep.subr.mxu0 %v83
    %386 = vmatpush1.msra.mxu0 %v82
    %387 = vmatprep.subr.mxu0 %v87
    %388 = vmatpush1.msra.mxu0 %v86
    %389 = vmatprep.subr.mxu0 %v91
    %390 = vmatpush1.msra.mxu0 %v90
    %391 = vmatprep.subr.mxu0 %v95
    %392 = vmatpush1.msra.mxu0 %v94
    %393 = vmatprep.subr.mxu0 %v99
    %394 = vmatpush1.msra.mxu0 %v98
    %395 = vmatprep.subr.mxu0 %v103
    %396 = vmatpush1.msra.mxu0 %v102
    %397 = vmatprep.subr.mxu0 %v107
    %398 = vmatpush1.msra.mxu0 %v106
    %399 = vmatprep.subr.mxu0 %v111
    %400 = vmatpush1.msra.mxu0 %v110
    %401 = vmatprep.subr.mxu0 %v115
    %402 = vmatpush1.msra.mxu0 %v114
    %403 = vmatprep.subr.mxu0 %v119
    %404 = vmatpush1.msra.mxu0 %v118
    %405 = vmatprep.subr.mxu0 %v123
    %406 = vmatpush1.msra.mxu0 %v122
    %407 = vmatprep.subr.mxu0 %v127
    %408 = vmatpush1.msra.mxu0 %v126
    %409 = vmatprep.subr.mxu0 %v131
    %410 = vmatpush1.msra.mxu0 %v130
    %411 = vmatprep.subr.mxu0 0.0
    %412 = vmatpush1.msra.mxu0 0.0
    %413 = vmatprep.subr.mxu0 0.0
    %414 = vmatpush1.msra.mxu0 0.0
    %415 = vmatprep.subr.mxu0 0.0
    %416 = vmatpush1.msra.mxu0 0.0
    %417 = vmatprep.subr.mxu0 0.0
    %418 = vmatpush1.msra.mxu0 0.0
    %419 = vmatprep.subr.mxu0 0.0
    %420 = vmatpush1.msra.mxu0 0.0
    %421 = vmatprep.subr.mxu0 0.0
    %422 = vmatpush1.msra.mxu0 0.0
    %423 = vmatprep.subr.mxu0 0.0
    %424 = vmatpush1.msra.mxu0 0.0
    %425 = vmatprep.subr.mxu0 0.0
    %426 = vmatpush1.msra.mxu0 0.0
    %427 = vmatprep.subr.mxu0 0.0
    %428 = vmatpush1.msra.mxu0 0.0
    %429 = vmatprep.subr.mxu0 0.0
    %430 = vmatpush1.msra.mxu0 0.0
    %431 = vmatprep.subr.mxu0 0.0
    %432 = vmatpush1.msra.mxu0 0.0
    %433 = vmatprep.subr.mxu0 0.0
    %434 = vmatpush1.msra.mxu0 0.0
    %435 = vmatprep.subr.mxu0 0.0
    %436 = vmatpush1.msra.mxu0 0.0
    %437 = vmatprep.subr.mxu0 0.0
    %438 = vmatpush1.msra.mxu0 0.0
    %439 = vmatprep.subr.mxu0 0.0
    %440 = vmatpush1.msra.mxu0 0.0
    %441 = vmatprep.subr.mxu0 0.0
    %442 = vmatpush1.msra.mxu0 0.0
    %443 = vmatprep.mubr.f32.mxu0 0.0
    %444 = vmatmul.mubr.f32.gmra.mrb[0].mxu0 %v301
    %v445 = vpop.f32.mrb[0].mxu0
    %v446 = vadd.f32 0.0, %v445
    %v447 = vpop.f32.mrb[0].mxu0
    %v448 = vadd.f32 0.0, %v447
    %449 = vdwg.mxu0
    %v450 = vadd.f32 %v304, %v375
    %v451 = vadd.f32 %v305, %v377
    %v452 = vadd.f32 %v306, %v446
    %v453 = vadd.f32 %v307, %v448
    %v454 = vmul.f32 %v450, 0.5
    %v455 = vtanh.pop %v454
    %v456 = vadd.f32 %v455, 1.0
    %v457 = vmul.f32 %v456, 0.5
    %v458 = vmul.f32 %v451, 0.5
    %v459 = vtanh.pop %v458
    %v460 = vadd.f32 %v459, 1.0
    %v461 = vmul.f32 %v460, 0.5
    %v462 = vtanh.pop %v452
    %v463 = vmul.f32 %v461, %v295
    %v464 = vmul.f32 %v457, %v462
    %v465 = vadd.f32 %v463, %v464
    %v466 = vmul.f32 %v453, 0.5
    %v467 = vtanh.pop %v466
    %v468 = vadd.f32 %v467, 1.0
    %v469 = vmul.f32 %v468, 0.5
    %v470 = vtanh.pop %v465
    %v471 = vmul.f32 %v469, %v470
    %s472 = scalar_lea.vmem [#allocation10], 8
    %473 = vst [vmem:[%s472] sm:$0xff] %v471
    %s474 = scalar_lea.vmem [#allocation4], 64
    %v475 = vld [vmem:[%s474] sm:$0xff]
    %v476 = vld [vmem:[%s474 + $0x8] sm:$0xff]
    %v477 = vld [vmem:[%s474 + $0x10] sm:$0xff]
    %v478 = vld [vmem:[%s474 + $0x18] sm:$0xff]
    %479 = vmatprep.subr.mxu0 %v69
    %480 = vmatpush1.msra.mxu0 %v68
    %481 = vmatprep.subr.mxu0 %v73
    %482 = vmatpush1.msra.mxu0 %v72
    %483 = vmatprep.subr.mxu0 %v77
    %484 = vmatpush1.msra.mxu0 %v76
    %485 = vmatprep.subr.mxu0 %v81
    %486 = vmatpush1.msra.mxu0 %v80
    %487 = vmatprep.subr.mxu0 %v85
    %488 = vmatpush1.msra.mxu0 %v84
    %489 = vmatprep.subr.mxu0 %v89
    %490 = vmatpush1.msra.mxu0 %v88
    %491 = vmatprep.subr.mxu0 %v93
    %492 = vmatpush1.msra.mxu0 %v92
    %493 = vmatprep.subr.mxu0 %v97
    %494 = vmatpush1.msra.mxu0 %v96
    %495 = vmatprep.subr.mxu0 %v101
    %496 = vmatpush1.msra.mxu0 %v100
    %497 = vmatprep.subr.mxu0 %v105
    %498 = vmatpush1.msra.mxu0 %v104
    %499 = vmatprep.subr.mxu0 %v109
    %500 = vmatpush1.msra.mxu0 %v108
    %501 = vmatprep.subr.mxu0 %v113
    %502 = vmatpush1.msra.mxu0 %v112
    %503 = vmatprep.subr.mxu0 %v117
    %504 = vmatpush1.msra.mxu0 %v116
    %505 = vmatprep.subr.mxu0 %v121
    %506 = vmatpush1.msra.mxu0 %v120
    %507 = vmatprep.subr.mxu0 %v125
    %508 = vmatpush1.msra.mxu0 %v124
    %509 = vmatprep.subr.mxu0 %v129
    %510 = vmatpush1.msra.mxu0 %v128
    %511 = vmatprep.subr.mxu0 0.0
    %512 = vmatpush1.msra.mxu0 0.0
    %513 = vmatprep.subr.mxu0 0.0
    %514 = vmatpush1.msra.mxu0 0.0
    %515 = vmatprep.subr.mxu0 0.0
    %516 = vmatpush1.msra.mxu0 0.0
    %517 = vmatprep.subr.mxu0 0.0
    %518 = vmatpush1.msra.mxu0 0.0
    %519 = vmatprep.subr.mxu0 0.0
    %520 = vmatpush1.msra.mxu0 0.0
    %521 = vmatprep.subr.mxu0 0.0
    %522 = vmatpush1.msra.mxu0 0.0
    %523 = vmatprep.subr.mxu0 0.0
    %524 = vmatpush1.msra.mxu0 0.0
    %525 = vmatprep.subr.mxu0 0.0
    %526 = vmatpush1.msra.mxu0 0.0
    %527 = vmatprep.subr.mxu0 0.0
    %528 = vmatpush1.msra.mxu0 0.0
    %529 = vmatprep.subr.mxu0 0.0
    %530 = vmatpush1.msra.mxu0 0.0
    %531 = vmatprep.subr.mxu0 0.0
    %532 = vmatpush1.msra.mxu0 0.0
    %533 = vmatprep.subr.mxu0 0.0
    %534 = vmatpush1.msra.mxu0 0.0
    %535 = vmatprep.subr.mxu0 0.0
    %536 = vmatpush1.msra.mxu0 0.0
    %537 = vmatprep.subr.mxu0 0.0
    %538 = vmatpush1.msra.mxu0 0.0
    %539 = vmatprep.subr.mxu0 0.0
    %540 = vmatpush1.msra.mxu0 0.0
    %541 = vmatprep.subr.mxu0 0.0
    %542 = vmatpush1.msra.mxu0 0.0
    %543 = vmatprep.mubr.f32.mxu0 0.0
    %544 = vmatmul.mubr.f32.gmra.mrb[0].mxu0 %v471
    %v545 = vpop.f32.mrb[0].mxu0
    %v546 = vadd.f32 0.0, %v545
    %v547 = vpop.f32.mrb[0].mxu0
    %v548 = vadd.f32 0.0, %v547
    %549 = vdwg.mxu0
    %550 = vmatprep.subr.mxu0 %v71
    %551 = vmatpush1.msra.mxu0 %v70
    %552 = vmatprep.subr.mxu0 %v75
    %553 = vmatpush1.msra.mxu0 %v74
    %554 = vmatprep.subr.mxu0 %v79
    %555 = vmatpush1.msra.mxu0 %v78
    %556 = vmatprep.subr.mxu0 %v83
    %557 = vmatpush1.msra.mxu0 %v82
    %558 = vmatprep.subr.mxu0 %v87
    %559 = vmatpush1.msra.mxu0 %v86
    %560 = vmatprep.subr.mxu0 %v91
    %561 = vmatpush1.msra.mxu0 %v90
    %562 = vmatprep.subr.mxu0 %v95
    %563 = vmatpush1.msra.mxu0 %v94
    %564 = vmatprep.subr.mxu0 %v99
    %565 = vmatpush1.msra.mxu0 %v98
    %566 = vmatprep.subr.mxu0 %v103
    %567 = vmatpush1.msra.mxu0 %v102
    %568 = vmatprep.subr.mxu0 %v107
    %569 = vmatpush1.msra.mxu0 %v106
    %570 = vmatprep.subr.mxu0 %v111
    %571 = vmatpush1.msra.mxu0 %v110
    %572 = vmatprep.subr.mxu0 %v115
    %573 = vmatpush1.msra.mxu0 %v114
    %574 = vmatprep.subr.mxu0 %v119
    %575 = vmatpush1.msra.mxu0 %v118
    %576 = vmatprep.subr.mxu0 %v123
    %577 = vmatpush1.msra.mxu0 %v122
    %578 = vmatprep.subr.mxu0 %v127
    %579 = vmatpush1.msra.mxu0 %v126
    %580 = vmatprep.subr.mxu0 %v131
    %581 = vmatpush1.msra.mxu0 %v130
    %582 = vmatprep.subr.mxu0 0.0
    %583 = vmatpush1.msra.mxu0 0.0
    %584 = vmatprep.subr.mxu0 0.0
    %585 = vmatpush1.msra.mxu0 0.0
    %586 = vmatprep.subr.mxu0 0.0
    %587 = vmatpush1.msra.mxu0 0.0
    %588 = vmatprep.subr.mxu0 0.0
    %589 = vmatpush1.msra.mxu0 0.0
    %590 = vmatprep.subr.mxu0 0.0
    %591 = vmatpush1.msra.mxu0 0.0
    %592 = vmatprep.subr.mxu0 0.0
    %593 = vmatpush1.msra.mxu0 0.0
    %594 = vmatprep.subr.mxu0 0.0
    %595 = vmatpush1.msra.mxu0 0.0
    %596 = vmatprep.subr.mxu0 0.0
    %597 = vmatpush1.msra.mxu0 0.0
    %598 = vmatprep.subr.mxu0 0.0
    %599 = vmatpush1.msra.mxu0 0.0
    %600 = vmatprep.subr.mxu0 0.0
    %601 = vmatpush1.msra.mxu0 0.0
    %602 = vmatprep.subr.mxu0 0.0
    %603 = vmatpush1.msra.mxu0 0.0
    %604 = vmatprep.subr.mxu0 0.0
    %605 = vmatpush1.msra.mxu0 0.0
    %606 = vmatprep.subr.mxu0 0.0
    %607 = vmatpush1.msra.mxu0 0.0
    %608 = vmatprep.subr.mxu0 0.0
    %609 = vmatpush1.msra.mxu0 0.0
    %610 = vmatprep.subr.mxu0 0.0
    %611 = vmatpush1.msra.mxu0 0.0
    %612 = vmatprep.subr.mxu0 0.0
    %613 = vmatpush1.msra.mxu0 0.0
    %614 = vmatprep.mubr.f32.mxu0 0.0
    %615 = vmatmul.mubr.f32.gmra.mrb[0].mxu0 %v471
    %v616 = vpop.f32.mrb[0].mxu0
    %v617 = vadd.f32 0.0, %v616
    %v618 = vpop.f32.mrb[0].mxu0
    %v619 = vadd.f32 0.0, %v618
    %620 = vdwg.mxu0
    %v621 = vadd.f32 %v475, %v546
    %v622 = vadd.f32 %v476, %v548
    %v623 = vadd.f32 %v477, %v617
    %v624 = vadd.f32 %v478, %v619
    %v625 = vmul.f32 %v621, 0.5
    %v626 = vtanh.pop %v625
    %v627 = vadd.f32 %v626, 1.0
    %v628 = vmul.f32 %v627, 0.5
    %v629 = vmul.f32 %v622, 0.5
    %v630 = vtanh.pop %v629
    %v631 = vadd.f32 %v630, 1.0
    %v632 = vmul.f32 %v631, 0.5
    %v633 = vtanh.pop %v623
    %v634 = vmul.f32 %v632, %v465
    %v635 = vmul.f32 %v628, %v633
    %v636 = vadd.f32 %v634, %v635
    %v637 = vmul.f32 %v624, 0.5
    %v638 = vtanh.pop %v637
    %v639 = vadd.f32 %v638, 1.0
    %v640 = vmul.f32 %v639, 0.5
    %v641 = vtanh.pop %v636
    %v642 = vmul.f32 %v640, %v641
    %s643 = scalar_lea.vmem [#allocation10], 16
    %644 = vst [vmem:[%s643] sm:$0xff] %v642
    %s645 = scalar_lea.vmem [#allocation4], 96
    %v646 = vld [vmem:[%s645] sm:$0xff]
    %v647 = vld [vmem:[%s645 + $0x8] sm:$0xff]
    %v648 = vld [vmem:[%s645 + $0x10] sm:$0xff]
    %v649 = vld [vmem:[%s645 + $0x18] sm:$0xff]
    %650 = vmatprep.subr.mxu0 %v69
    %651 = vmatpush1.msra.mxu0 %v68
    %652 = vmatprep.subr.mxu0 %v73
    %653 = vmatpush1.msra.mxu0 %v72
    %654 = vmatprep.subr.mxu0 %v77
    %655 = vmatpush1.msra.mxu0 %v76
    %656 = vmatprep.subr.mxu0 %v81
    %657 = vmatpush1.msra.mxu0 %v80
    %658 = vmatprep.subr.mxu0 %v85
    %659 = vmatpush1.msra.mxu0 %v84
    %660 = vmatprep.subr.mxu0 %v89
    %661 = vmatpush1.msra.mxu0 %v88
    %662 = vmatprep.subr.mxu0 %v93
    %663 = vmatpush1.msra.mxu0 %v92
    %664 = vmatprep.subr.mxu0 %v97
    %665 = vmatpush1.msra.mxu0 %v96
    %666 = vmatprep.subr.mxu0 %v101
    %667 = vmatpush1.msra.mxu0 %v100
    %668 = vmatprep.subr.mxu0 %v105
    %669 = vmatpush1.msra.mxu0 %v104
    %670 = vmatprep.subr.mxu0 %v109
    %671 = vmatpush1.msra.mxu0 %v108
    %672 = vmatprep.subr.mxu0 %v113
    %673 = vmatpush1.msra.mxu0 %v112
    %674 = vmatprep.subr.mxu0 %v117
    %675 = vmatpush1.msra.mxu0 %v116
    %676 = vmatprep.subr.mxu0 %v121
    %677 = vmatpush1.msra.mxu0 %v120
    %678 = vmatprep.subr.mxu0 %v125
    %679 = vmatpush1.msra.mxu0 %v124
    %680 = vmatprep.subr.mxu0 %v129
    %681 = vmatpush1.msra.mxu0 %v128
    %682 = vmatprep.subr.mxu0 0.0
    %683 = vmatpush1.msra.mxu0 0.0
    %684 = vmatprep.subr.mxu0 0.0
    %685 = vmatpush1.msra.mxu0 0.0
    %686 = vmatprep.subr.mxu0 0.0
    %687 = vmatpush1.msra.mxu0 0.0
    %688 = vmatprep.subr.mxu0 0.0
    %689 = vmatpush1.msra.mxu0 0.0
    %690 = vmatprep.subr.mxu0 0.0
    %691 = vmatpush1.msra.mxu0 0.0
    %692 = vmatprep.subr.mxu0 0.0
    %693 = vmatpush1.msra.mxu0 0.0
    %694 = vmatprep.subr.mxu0 0.0
    %695 = vmatpush1.msra.mxu0 0.0
    %696 = vmatprep.subr.mxu0 0.0
    %697 = vmatpush1.msra.mxu0 0.0
    %698 = vmatprep.subr.mxu0 0.0
    %699 = vmatpush1.msra.mxu0 0.0
    %700 = vmatprep.subr.mxu0 0.0
    %701 = vmatpush1.msra.mxu0 0.0
    %702 = vmatprep.subr.mxu0 0.0
    %703 = vmatpush1.msra.mxu0 0.0
    %704 = vmatprep.subr.mxu0 0.0
    %705 = vmatpush1.msra.mxu0 0.0
    %706 = vmatprep.subr.mxu0 0.0
    %707 = vmatpush1.msra.mxu0 0.0
    %708 = vmatprep.subr.mxu0 0.0
    %709 = vmatpush1.msra.mxu0 0.0
    %710 = vmatprep.subr.mxu0 0.0
    %711 = vmatpush1.msra.mxu0 0.0
    %712 = vmatprep.subr.mxu0 0.0
    %713 = vmatpush1.msra.mxu0 0.0
    %714 = vmatprep.mubr.f32.mxu0 0.0
    %715 = vmatmul.mubr.f32.gmra.mrb[0].mxu0 %v642
    %v716 = vpop.f32.mrb[0].mxu0
    %v717 = vadd.f32 0.0, %v716
    %v718 = vpop.f32.mrb[0].mxu0
    %v719 = vadd.f32 0.0, %v718
    %720 = vdwg.mxu0
    %721 = vmatprep.subr.mxu0 %v71
    %722 = vmatpush1.msra.mxu0 %v70
    %723 = vmatprep.subr.mxu0 %v75
    %724 = vmatpush1.msra.mxu0 %v74
    %725 = vmatprep.subr.mxu0 %v79
    %726 = vmatpush1.msra.mxu0 %v78
    %727 = vmatprep.subr.mxu0 %v83
    %728 = vmatpush1.msra.mxu0 %v82
    %729 = vmatprep.subr.mxu0 %v87
    %730 = vmatpush1.msra.mxu0 %v86
    %731 = vmatprep.subr.mxu0 %v91
    %732 = vmatpush1.msra.mxu0 %v90
    %733 = vmatprep.subr.mxu0 %v95
    %734 = vmatpush1.msra.mxu0 %v94
    %735 = vmatprep.subr.mxu0 %v99
    %736 = vmatpush1.msra.mxu0 %v98
    %737 = vmatprep.subr.mxu0 %v103
    %738 = vmatpush1.msra.mxu0 %v102
    %739 = vmatprep.subr.mxu0 %v107
    %740 = vmatpush1.msra.mxu0 %v106
    %741 = vmatprep.subr.mxu0 %v111
    %742 = vmatpush1.msra.mxu0 %v110
    %743 = vmatprep.subr.mxu0 %v115
    %744 = vmatpush1.msra.mxu0 %v114
    %745 = vmatprep.subr.mxu0 %v119
    %746 = vmatpush1.msra.mxu0 %v118
    %747 = vmatprep.subr.mxu0 %v123
    %748 = vmatpush1.msra.mxu0 %v122
    %749 = vmatprep.subr.mxu0 %v127
    %750 = vmatpush1.msra.mxu0 %v126
    %751 = vmatprep.subr.mxu0 %v131
    %752 = vmatpush1.msra.mxu0 %v130
    %753 = vmatprep.subr.mxu0 0.0
    %754 = vmatpush1.msra.mxu0 0.0
    %755 = vmatprep.subr.mxu0 0.0
    %756 = vmatpush1.msra.mxu0 0.0
    %757 = vmatprep.subr.mxu0 0.0
    %758 = vmatpush1.msra.mxu0 0.0
    %759 = vmatprep.subr.mxu0 0.0
    %760 = vmatpush1.msra.mxu0 0.0
    %761 = vmatprep.subr.mxu0 0.0
    %762 = vmatpush1.msra.mxu0 0.0
    %763 = vmatprep.subr.mxu0 0.0
    %764 = vmatpush1.msra.mxu0 0.0
    %765 = vmatprep.subr.mxu0 0.0
    %766 = vmatpush1.msra.mxu0 0.0
    %767 = vmatprep.subr.mxu0 0.0
    %768 = vmatpush1.msra.mxu0 0.0
    %769 = vmatprep.subr.mxu0 0.0
    %770 = vmatpush1.msra.mxu0 0.0
    %771 = vmatprep.subr.mxu0 0.0
    %772 = vmatpush1.msra.mxu0 0.0
    %773 = vmatprep.subr.mxu0 0.0
    %774 = vmatpush1.msra.mxu0 0.0
    %775 = vmatprep.subr.mxu0 0.0
    %776 = vmatpush1.msra.mxu0 0.0
    %777 = vmatprep.subr.mxu0 0.0
    %778 = vmatpush1.msra.mxu0 0.0
    %779 = vmatprep.subr.mxu0 0.0
    %780 = vmatpush1.msra.mxu0 0.0
    %781 = vmatprep.subr.mxu0 0.0
    %782 = vmatpush1.msra.mxu0 0.0
    %783 = vmatprep.subr.mxu0 0.0
    %784 = vmatpush1.msra.mxu0 0.0
    %785 = vmatprep.mubr.f32.mxu0 0.0
    %786 = vmatmul.mubr.f32.gmra.mrb[0].mxu0 %v642
    %v787 = vpop.f32.mrb[0].mxu0
    %v788 = vadd.f32 0.0, %v787
    %v789 = vpop.f32.mrb[0].mxu0
    %v790 = vadd.f32 0.0, %v789
    %791 = vdwg.mxu0
    %v792 = vadd.f32 %v646, %v717
    %v793 = vadd.f32 %v647, %v719
    %v794 = vadd.f32 %v648, %v788
    %v795 = vadd.f32 %v649, %v790
    %v796 = vmul.f32 %v792, 0.5
    %v797 = vtanh.pop %v796
    %v798 = vadd.f32 %v797, 1.0
    %v799 = vmul.f32 %v798, 0.5
    %v800 = vmul.f32 %v793, 0.5
    %v801 = vtanh.pop %v800
    %v802 = vadd.f32 %v801, 1.0
    %v803 = vmul.f32 %v802, 0.5
    %v804 = vtanh.pop %v794
    %v805 = vmul.f32 %v803, %v636
    %v806 = vmul.f32 %v799, %v804
    %v807 = vadd.f32 %v805, %v806
    %v808 = vmul.f32 %v795, 0.5
    %v809 = vtanh.pop %v808
    %v810 = vadd.f32 %v809, 1.0
    %v811 = vmul.f32 %v810, 0.5
    %v812 = vtanh.pop %v807
    %v813 = vmul.f32 %v811, %v812
    %s814 = scalar_lea.vmem [#allocation10], 24
    %815 = vst [vmem:[%s814] sm:$0xff] %v813
    %s816 = scalar_lea.vmem [#allocation4], 128
    %v817 = vld [vmem:[%s816] sm:$0xff]
    %v818 = vld [vmem:[%s816 + $0x8] sm:$0xff]
    %v819 = vld [vmem:[%s816 + $0x10] sm:$0xff]
    %v820 = vld [vmem:[%s816 + $0x18] sm:$0xff]
    %821 = vmatprep.subr.mxu0 %v69
    %822 = vmatpush1.msra.mxu0 %v68
    %823 = vmatprep.subr.mxu0 %v73
    %824 = vmatpush1.msra.mxu0 %v72
    %825 = vmatprep.subr.mxu0 %v77
    %826 = vmatpush1.msra.mxu0 %v76
    %827 = vmatprep.subr.mxu0 %v81
    %828 = vmatpush1.msra.mxu0 %v80
    %829 = vmatprep.subr.mxu0 %v85
    %830 = vmatpush1.msra.mxu0 %v84
    %831 = vmatprep.subr.mxu0 %v89
    %832 = vmatpush1.msra.mxu0 %v88
    %833 = vmatprep.subr.mxu0 %v93
    %834 = vmatpush1.msra.mxu0 %v92
    %835 = vmatprep.subr.mxu0 %v97
    %836 = vmatpush1.msra.mxu0 %v96
    %837 = vmatprep.subr.mxu0 %v101
    %838 = vmatpush1.msra.mxu0 %v100
    %839 = vmatprep.subr.mxu0 %v105
    %840 = vmatpush1.msra.mxu0 %v104
    %841 = vmatprep.subr.mxu0 %v109
    %842 = vmatpush1.msra.mxu0 %v108
    %843 = vmatprep.subr.mxu0 %v113
    %844 = vmatpush1.msra.mxu0 %v112
    %845 = vmatprep.subr.mxu0 %v117
    %846 = vmatpush1.msra.mxu0 %v116
    %847 = vmatprep.subr.mxu0 %v121
    %848 = vmatpush1.msra.mxu0 %v120
    %849 = vmatprep.subr.mxu0 %v125
    %850 = vmatpush1.msra.mxu0 %v124
    %851 = vmatprep.subr.mxu0 %v129
    %852 = vmatpush1.msra.mxu0 %v128
    %853 = vmatprep.subr.mxu0 0.0
    %854 = vmatpush1.msra.mxu0 0.0
    %855 = vmatprep.subr.mxu0 0.0
    %856 = vmatpush1.msra.mxu0 0.0
    %857 = vmatprep.subr.mxu0 0.0
    %858 = vmatpush1.msra.mxu0 0.0
    %859 = vmatprep.subr.mxu0 0.0
    %860 = vmatpush1.msra.mxu0 0.0
    %861 = vmatprep.subr.mxu0 0.0
    %862 = vmatpush1.msra.mxu0 0.0
    %863 = vmatprep.subr.mxu0 0.0
    %864 = vmatpush1.msra.mxu0 0.0
    %865 = vmatprep.subr.mxu0 0.0
    %866 = vmatpush1.msra.mxu0 0.0
    %867 = vmatprep.subr.mxu0 0.0
    %868 = vmatpush1.msra.mxu0 0.0
    %869 = vmatprep.subr.mxu0 0.0
    %870 = vmatpush1.msra.mxu0 0.0
    %871 = vmatprep.subr.mxu0 0.0
    %872 = vmatpush1.msra.mxu0 0.0
    %873 = vmatprep.subr.mxu0 0.0
    %874 = vmatpush1.msra.mxu0 0.0
    %875 = vmatprep.subr.mxu0 0.0
    %876 = vmatpush1.msra.mxu0 0.0
    %877 = vmatprep.subr.mxu0 0.0
    %878 = vmatpush1.msra.mxu0 0.0
    %879 = vmatprep.subr.mxu0 0.0
    %880 = vmatpush1.msra.mxu0 0.0
    %881 = vmatprep.subr.mxu0 0.0
    %882 = vmatpush1.msra.mxu0 0.0
    %883 = vmatprep.subr.mxu0 0.0
    %884 = vmatpush1.msra.mxu0 0.0
    %885 = vmatprep.mubr.f32.mxu0 0.0
    %886 = vmatmul.mubr.f32.gmra.mrb[0].mxu0 %v813
    %v887 = vpop.f32.mrb[0].mxu0
    %v888 = vadd.f32 0.0, %v887
    %v889 = vpop.f32.mrb[0].mxu0
    %v890 = vadd.f32 0.0, %v889
    %891 = vdwg.mxu0
    %892 = vmatprep.subr.mxu0 %v71
    %893 = vmatpush1.msra.mxu0 %v70
    %894 = vmatprep.subr.mxu0 %v75
    %895 = vmatpush1.msra.mxu0 %v74
    %896 = vmatprep.subr.mxu0 %v79
    %897 = vmatpush1.msra.mxu0 %v78
    %898 = vmatprep.subr.mxu0 %v83
    %899 = vmatpush1.msra.mxu0 %v82
    %900 = vmatprep.subr.mxu0 %v87
    %901 = vmatpush1.msra.mxu0 %v86
    %902 = vmatprep.subr.mxu0 %v91
    %903 = vmatpush1.msra.mxu0 %v90
    %904 = vmatprep.subr.mxu0 %v95
    %905 = vmatpush1.msra.mxu0 %v94
    %906 = vmatprep.subr.mxu0 %v99
    %907 = vmatpush1.msra.mxu0 %v98
    %908 = vmatprep.subr.mxu0 %v103
    %909 = vmatpush1.msra.mxu0 %v102
    %910 = vmatprep.subr.mxu0 %v107
    %911 = vmatpush1.msra.mxu0 %v106
    %912 = vmatprep.subr.mxu0 %v111
    %913 = vmatpush1.msra.mxu0 %v110
    %914 = vmatprep.subr.mxu0 %v115
    %915 = vmatpush1.msra.mxu0 %v114
    %916 = vmatprep.subr.mxu0 %v119
    %917 = vmatpush1.msra.mxu0 %v118
    %918 = vmatprep.subr.mxu0 %v123
    %919 = vmatpush1.msra.mxu0 %v122
    %920 = vmatprep.subr.mxu0 %v127
    %921 = vmatpush1.msra.mxu0 %v126
    %922 = vmatprep.subr.mxu0 %v131
    %923 = vmatpush1.msra.mxu0 %v130
    %924 = vmatprep.subr.mxu0 0.0
    %925 = vmatpush1.msra.mxu0 0.0
    %926 = vmatprep.subr.mxu0 0.0
    %927 = vmatpush1.msra.mxu0 0.0
    %928 = vmatprep.subr.mxu0 0.0
    %929 = vmatpush1.msra.mxu0 0.0
    %930 = vmatprep.subr.mxu0 0.0
    %931 = vmatpush1.msra.mxu0 0.0
    %932 = vmatprep.subr.mxu0 0.0
    %933 = vmatpush1.msra.mxu0 0.0
    %934 = vmatprep.subr.mxu0 0.0
    %935 = vmatpush1.msra.mxu0 0.0
    %936 = vmatprep.subr.mxu0 0.0
    %937 = vmatpush1.msra.mxu0 0.0
    %938 = vmatprep.subr.mxu0 0.0
    %939 = vmatpush1.msra.mxu0 0.0
    %940 = vmatprep.subr.mxu0 0.0
    %941 = vmatpush1.msra.mxu0 0.0
    %942 = vmatprep.subr.mxu0 0.0
    %943 = vmatpush1.msra.mxu0 0.0
    %944 = vmatprep.subr.mxu0 0.0
    %945 = vmatpush1.msra.mxu0 0.0
    %946 = vmatprep.subr.mxu0 0.0
    %947 = vmatpush1.msra.mxu0 0.0
    %948 = vmatprep.subr.mxu0 0.0
    %949 = vmatpush1.msra.mxu0 0.0
    %950 = vmatprep.subr.mxu0 0.0
    %951 = vmatpush1.msra.mxu0 0.0
    %952 = vmatprep.subr.mxu0 0.0
    %953 = vmatpush1.msra.mxu0 0.0
    %954 = vmatprep.subr.mxu0 0.0
    %955 = vmatpush1.msra.mxu0 0.0
    %956 = vmatprep.mubr.f32.mxu0 0.0
    %957 = vmatmul.mubr.f32.gmra.mrb[0].mxu0 %v813
    %v958 = vpop.f32.mrb[0].mxu0
    %v959 = vadd.f32 0.0, %v958
    %v960 = vpop.f32.mrb[0].mxu0
    %v961 = vadd.f32 0.0, %v960
    %962 = vdwg.mxu0
    %v963 = vadd.f32 %v817, %v888
    %v964 = vadd.f32 %v818, %v890
    %v965 = vadd.f32 %v819, %v959
    %v966 = vadd.f32 %v820, %v961
    %v967 = vmul.f32 %v963, 0.5
    %v968 = vtanh.pop %v967
    %v969 = vadd.f32 %v968, 1.0
    %v970 = vmul.f32 %v969, 0.5
    %v971 = vmul.f32 %v964, 0.5
    %v972 = vtanh.pop %v971
    %v973 = vadd.f32 %v972, 1.0
    %v974 = vmul.f32 %v973, 0.5
    %v975 = vtanh.pop %v965
    %v976 = vmul.f32 %v974, %v807
    %v977 = vmul.f32 %v970, %v975
    %v978 = vadd.f32 %v976, %v977
    %v979 = vmul.f32 %v966, 0.5
    %v980 = vtanh.pop %v979
    %v981 = vadd.f32 %v980, 1.0
    %v982 = vmul.f32 %v981, 0.5
    %v983 = vtanh.pop %v978
    %v984 = vmul.f32 %v982, %v983
    %s985 = scalar_lea.vmem [#allocation10], 32
    %986 = vst [vmem:[%s985] sm:$0xff] %v984
    %s987 = scalar_lea.vmem [#allocation4], 160
    %v988 = vld [vmem:[%s987] sm:$0xff]
    %v989 = vld [vmem:[%s987 + $0x8] sm:$0xff]
    %v990 = vld [vmem:[%s987 + $0x10] sm:$0xff]
    %v991 = vld [vmem:[%s987 + $0x18] sm:$0xff]
    %992 = vmatprep.subr.mxu0 %v69
    %993 = vmatpush1.msra.mxu0 %v68
    %994 = vmatprep.subr.mxu0 %v73
    %995 = vmatpush1.msra.mxu0 %v72
    %996 = vmatprep.subr.mxu0 %v77
    %997 = vmatpush1.msra.mxu0 %v76
    %998 = vmatprep.subr.mxu0 %v81
    %999 = vmatpush1.msra.mxu0 %v80
    %1000 = vmatprep.subr.mxu0 %v85
    %1001 = vmatpush1.msra.mxu0 %v84
    %1002 = vmatprep.subr.mxu0 %v89
    %1003 = vmatpush1.msra.mxu0 %v88
    %1004 = vmatprep.subr.mxu0 %v93
    %1005 = vmatpush1.msra.mxu0 %v92
    %1006 = vmatprep.subr.mxu0 %v97
    %1007 = vmatpush1.msra.mxu0 %v96
    %1008 = vmatprep.subr.mxu0 %v101
    %1009 = vmatpush1.msra.mxu0 %v100
    %1010 = vmatprep.subr.mxu0 %v105
    %1011 = vmatpush1.msra.mxu0 %v104
    %1012 = vmatprep.subr.mxu0 %v109
    %1013 = vmatpush1.msra.mxu0 %v108
    %1014 = vmatprep.subr.mxu0 %v113
    %1015 = vmatpush1.msra.mxu0 %v112
    %1016 = vmatprep.subr.mxu0 %v117
    %1017 = vmatpush1.msra.mxu0 %v116
    %1018 = vmatprep.subr.mxu0 %v121
    %1019 = vmatpush1.msra.mxu0 %v120
    %1020 = vmatprep.subr.mxu0 %v125
    %1021 = vmatpush1.msra.mxu0 %v124
    %1022 = vmatprep.subr.mxu0 %v129
    %1023 = vmatpush1.msra.mxu0 %v128
    %1024 = vmatprep.subr.mxu0 0.0
    %1025 = vmatpush1.msra.mxu0 0.0
    %1026 = vmatprep.subr.mxu0 0.0
    %1027 = vmatpush1.msra.mxu0 0.0
    %1028 = vmatprep.subr.mxu0 0.0
    %1029 = vmatpush1.msra.mxu0 0.0
    %1030 = vmatprep.subr.mxu0 0.0
    %1031 = vmatpush1.msra.mxu0 0.0
    %1032 = vmatprep.subr.mxu0 0.0
    %1033 = vmatpush1.msra.mxu0 0.0
    %1034 = vmatprep.subr.mxu0 0.0
    %1035 = vmatpush1.msra.mxu0 0.0
    %1036 = vmatprep.subr.mxu0 0.0
    %1037 = vmatpush1.msra.mxu0 0.0
    %1038 = vmatprep.subr.mxu0 0.0
    %1039 = vmatpush1.msra.mxu0 0.0
    %1040 = vmatprep.subr.mxu0 0.0
    %1041 = vmatpush1.msra.mxu0 0.0
    %1042 = vmatprep.subr.mxu0 0.0
    %1043 = vmatpush1.msra.mxu0 0.0
    %1044 = vmatprep.subr.mxu0 0.0
    %1045 = vmatpush1.msra.mxu0 0.0
    %1046 = vmatprep.subr.mxu0 0.0
    %1047 = vmatpush1.msra.mxu0 0.0
    %1048 = vmatprep.subr.mxu0 0.0
    %1049 = vmatpush1.msra.mxu0 0.0
    %1050 = vmatprep.subr.mxu0 0.0
    %1051 = vmatpush1.msra.mxu0 0.0
    %1052 = vmatprep.subr.mxu0 0.0
    %1053 = vmatpush1.msra.mxu0 0.0
    %1054 = vmatprep.subr.mxu0 0.0
    %1055 = vmatpush1.msra.mxu0 0.0
    %1056 = vmatprep.mubr.f32.mxu0 0.0
    %1057 = vmatmul.mubr.f32.gmra.mrb[0].mxu0 %v984
    %v1058 = vpop.f32.mrb[0].mxu0
    %v1059 = vadd.f32 0.0, %v1058
    %v1060 = vpop.f32.mrb[0].mxu0
    %v1061 = vadd.f32 0.0, %v1060
    %1062 = vdwg.mxu0
    %1063 = vmatprep.subr.mxu0 %v71
    %1064 = vmatpush1.msra.mxu0 %v70
    %1065 = vmatprep.subr.mxu0 %v75
    %1066 = vmatpush1.msra.mxu0 %v74
    %1067 = vmatprep.subr.mxu0 %v79
    %1068 = vmatpush1.msra.mxu0 %v78
    %1069 = vmatprep.subr.mxu0 %v83
    %1070 = vmatpush1.msra.mxu0 %v82
    %1071 = vmatprep.subr.mxu0 %v87
    %1072 = vmatpush1.msra.mxu0 %v86
    %1073 = vmatprep.subr.mxu0 %v91
    %1074 = vmatpush1.msra.mxu0 %v90
    %1075 = vmatprep.subr.mxu0 %v95
    %1076 = vmatpush1.msra.mxu0 %v94
    %1077 = vmatprep.subr.mxu0 %v99
    %1078 = vmatpush1.msra.mxu0 %v98
    %1079 = vmatprep.subr.mxu0 %v103
    %1080 = vmatpush1.msra.mxu0 %v102
    %1081 = vmatprep.subr.mxu0 %v107
    %1082 = vmatpush1.msra.mxu0 %v106
    %1083 = vmatprep.subr.mxu0 %v111
    %1084 = vmatpush1.msra.mxu0 %v110
    %1085 = vmatprep.subr.mxu0 %v115
    %1086 = vmatpush1.msra.mxu0 %v114
    %1087 = vmatprep.subr.mxu0 %v119
    %1088 = vmatpush1.msra.mxu0 %v118
    %1089 = vmatprep.subr.mxu0 %v123
    %1090 = vmatpush1.msra.mxu0 %v122
    %1091 = vmatprep.subr.mxu0 %v127
    %1092 = vmatpush1.msra.mxu0 %v126
    %1093 = vmatprep.subr.mxu0 %v131
    %1094 = vmatpush1.msra.mxu0 %v130
    %1095 = vmatprep.subr.mxu0 0.0
    %1096 = vmatpush1.msra.mxu0 0.0
    %1097 = vmatprep.subr.mxu0 0.0
    %1098 = vmatpush1.msra.mxu0 0.0
    %1099 = vmatprep.subr.mxu0 0.0
    %1100 = vmatpush1.msra.mxu0 0.0
    %1101 = vmatprep.subr.mxu0 0.0
    %1102 = vmatpush1.msra.mxu0 0.0
    %1103 = vmatprep.subr.mxu0 0.0
    %1104 = vmatpush1.msra.mxu0 0.0
    %1105 = vmatprep.subr.mxu0 0.0
    %1106 = vmatpush1.msra.mxu0 0.0
    %1107 = vmatprep.subr.mxu0 0.0
    %1108 = vmatpush1.msra.mxu0 0.0
    %1109 = vmatprep.subr.mxu0 0.0
    %1110 = vmatpush1.msra.mxu0 0.0
    %1111 = vmatprep.subr.mxu0 0.0
    %1112 = vmatpush1.msra.mxu0 0.0
    %1113 = vmatprep.subr.mxu0 0.0
    %1114 = vmatpush1.msra.mxu0 0.0
    %1115 = vmatprep.subr.mxu0 0.0
    %1116 = vmatpush1.msra.mxu0 0.0
    %1117 = vmatprep.subr.mxu0 0.0
    %1118 = vmatpush1.msra.mxu0 0.0
    %1119 = vmatprep.subr.mxu0 0.0
    %1120 = vmatpush1.msra.mxu0 0.0
    %1121 = vmatprep.subr.mxu0 0.0
    %1122 = vmatpush1.msra.mxu0 0.0
    %1123 = vmatprep.subr.mxu0 0.0
    %1124 = vmatpush1.msra.mxu0 0.0
    %1125 = vmatprep.subr.mxu0 0.0
    %1126 = vmatpush1.msra.mxu0 0.0
    %1127 = vmatprep.mubr.f32.mxu0 0.0
    %1128 = vmatmul.mubr.f32.gmra.mrb[0].mxu0 %v984
    %v1129 = vpop.f32.mrb[0].mxu0
    %v1130 = vadd.f32 0.0, %v1129
    %v1131 = vpop.f32.mrb[0].mxu0
    %v1132 = vadd.f32 0.0, %v1131
    %1133 = vdwg.mxu0
    %v1134 = vadd.f32 %v988, %v1059
    %v1135 = vadd.f32 %v989, %v1061
    %v1136 = vadd.f32 %v990, %v1130
    %v1137 = vadd.f32 %v991, %v1132
    %v1138 = vmul.f32 %v1134, 0.5
    %v1139 = vtanh.pop %v1138
    %v1140 = vadd.f32 %v1139, 1.0
    %v1141 = vmul.f32 %v1140, 0.5
    %v1142 = vmul.f32 %v1135, 0.5
    %v1143 = vtanh.pop %v1142
    %v1144 = vadd.f32 %v1143, 1.0
    %v1145 = vmul.f32 %v1144, 0.5
    %v1146 = vtanh.pop %v1136
    %v1147 = vmul.f32 %v1145, %v978
    %v1148 = vmul.f32 %v1141, %v1146
    %v1149 = vadd.f32 %v1147, %v1148
    %v1150 = vmul.f32 %v1137, 0.5
    %v1151 = vtanh.pop %v1150
    %v1152 = vadd.f32 %v1151, 1.0
    %v1153 = vmul.f32 %v1152, 0.5
    %v1154 = vtanh.pop %v1149
    %v1155 = vmul.f32 %v1153, %v1154
    %s1156 = scalar_lea.vmem [#allocation10], 40
    %1157 = vst [vmem:[%s1156] sm:$0xff] %v1155
    %s1158 = scalar_lea.vmem [#allocation4], 192
    %v1159 = vld [vmem:[%s1158] sm:$0xff]
    %v1160 = vld [vmem:[%s1158 + $0x8] sm:$0xff]
    %v1161 = vld [vmem:[%s1158 + $0x10] sm:$0xff]
    %v1162 = vld [vmem:[%s1158 + $0x18] sm:$0xff]
    %1163 = vmatprep.subr.mxu0 %v69
    %1164 = vmatpush1.msra.mxu0 %v68
    %1165 = vmatprep.subr.mxu0 %v73
    %1166 = vmatpush1.msra.mxu0 %v72
    %1167 = vmatprep.subr.mxu0 %v77
    %1168 = vmatpush1.msra.mxu0 %v76
    %1169 = vmatprep.subr.mxu0 %v81
    %1170 = vmatpush1.msra.mxu0 %v80
    %1171 = vmatprep.subr.mxu0 %v85
    %1172 = vmatpush1.msra.mxu0 %v84
    %1173 = vmatprep.subr.mxu0 %v89
    %1174 = vmatpush1.msra.mxu0 %v88
    %1175 = vmatprep.subr.mxu0 %v93
    %1176 = vmatpush1.msra.mxu0 %v92
    %1177 = vmatprep.subr.mxu0 %v97
    %1178 = vmatpush1.msra.mxu0 %v96
    %1179 = vmatprep.subr.mxu0 %v101
    %1180 = vmatpush1.msra.mxu0 %v100
    %1181 = vmatprep.subr.mxu0 %v105
    %1182 = vmatpush1.msra.mxu0 %v104
    %1183 = vmatprep.subr.mxu0 %v109
    %1184 = vmatpush1.msra.mxu0 %v108
    %1185 = vmatprep.subr.mxu0 %v113
    %1186 = vmatpush1.msra.mxu0 %v112
    %1187 = vmatprep.subr.mxu0 %v117
    %1188 = vmatpush1.msra.mxu0 %v116
    %1189 = vmatprep.subr.mxu0 %v121
    %1190 = vmatpush1.msra.mxu0 %v120
    %1191 = vmatprep.subr.mxu0 %v125
    %1192 = vmatpush1.msra.mxu0 %v124
    %1193 = vmatprep.subr.mxu0 %v129
    %1194 = vmatpush1.msra.mxu0 %v128
    %1195 = vmatprep.subr.mxu0 0.0
    %1196 = vmatpush1.msra.mxu0 0.0
    %1197 = vmatprep.subr.mxu0 0.0
    %1198 = vmatpush1.msra.mxu0 0.0
    %1199 = vmatprep.subr.mxu0 0.0
    %1200 = vmatpush1.msra.mxu0 0.0
    %1201 = vmatprep.subr.mxu0 0.0
    %1202 = vmatpush1.msra.mxu0 0.0
    %1203 = vmatprep.subr.mxu0 0.0
    %1204 = vmatpush1.msra.mxu0 0.0
    %1205 = vmatprep.subr.mxu0 0.0
    %1206 = vmatpush1.msra.mxu0 0.0
    %1207 = vmatprep.subr.mxu0 0.0
    %1208 = vmatpush1.msra.mxu0 0.0
    %1209 = vmatprep.subr.mxu0 0.0
    %1210 = vmatpush1.msra.mxu0 0.0
    %1211 = vmatprep.subr.mxu0 0.0
    %1212 = vmatpush1.msra.mxu0 0.0
    %1213 = vmatprep.subr.mxu0 0.0
    %1214 = vmatpush1.msra.mxu0 0.0
    %1215 = vmatprep.subr.mxu0 0.0
    %1216 = vmatpush1.msra.mxu0 0.0
    %1217 = vmatprep.subr.mxu0 0.0
    %1218 = vmatpush1.msra.mxu0 0.0
    %1219 = vmatprep.subr.mxu0 0.0
    %1220 = vmatpush1.msra.mxu0 0.0
    %1221 = vmatprep.subr.mxu0 0.0
    %1222 = vmatpush1.msra.mxu0 0.0
    %1223 = vmatprep.subr.mxu0 0.0
    %1224 = vmatpush1.msra.mxu0 0.0
    %1225 = vmatprep.subr.mxu0 0.0
    %1226 = vmatpush1.msra.mxu0 0.0
    %1227 = vmatprep.mubr.f32.mxu0 0.0
    %1228 = vmatmul.mubr.f32.gmra.mrb[0].mxu0 %v1155
    %v1229 = vpop.f32.mrb[0].mxu0
    %v1230 = vadd.f32 0.0, %v1229
    %v1231 = vpop.f32.mrb[0].mxu0
    %v1232 = vadd.f32 0.0, %v1231
    %1233 = vdwg.mxu0
    %1234 = vmatprep.subr.mxu0 %v71
    %1235 = vmatpush1.msra.mxu0 %v70
    %1236 = vmatprep.subr.mxu0 %v75
    %1237 = vmatpush1.msra.mxu0 %v74
    %1238 = vmatprep.subr.mxu0 %v79
    %1239 = vmatpush1.msra.mxu0 %v78
    %1240 = vmatprep.subr.mxu0 %v83
    %1241 = vmatpush1.msra.mxu0 %v82
    %1242 = vmatprep.subr.mxu0 %v87
    %1243 = vmatpush1.msra.mxu0 %v86
    %1244 = vmatprep.subr.mxu0 %v91
    %1245 = vmatpush1.msra.mxu0 %v90
    %1246 = vmatprep.subr.mxu0 %v95
    %1247 = vmatpush1.msra.mxu0 %v94
    %1248 = vmatprep.subr.mxu0 %v99
    %1249 = vmatpush1.msra.mxu0 %v98
    %1250 = vmatprep.subr.mxu0 %v103
    %1251 = vmatpush1.msra.mxu0 %v102
    %1252 = vmatprep.subr.mxu0 %v107
    %1253 = vmatpush1.msra.mxu0 %v106
    %1254 = vmatprep.subr.mxu0 %v111
    %1255 = vmatpush1.msra.mxu0 %v110
    %1256 = vmatprep.subr.mxu0 %v115
    %1257 = vmatpush1.msra.mxu0 %v114
    %1258 = vmatprep.subr.mxu0 %v119
    %1259 = vmatpush1.msra.mxu0 %v118
    %1260 = vmatprep.subr.mxu0 %v123
    %1261 = vmatpush1.msra.mxu0 %v122
    %1262 = vmatprep.subr.mxu0 %v127
    %1263 = vmatpush1.msra.mxu0 %v126
    %1264 = vmatprep.subr.mxu0 %v131
    %1265 = vmatpush1.msra.mxu0 %v130
    %1266 = vmatprep.subr.mxu0 0.0
    %1267 = vmatpush1.msra.mxu0 0.0
    %1268 = vmatprep.subr.mxu0 0.0
    %1269 = vmatpush1.msra.mxu0 0.0
    %1270 = vmatprep.subr.mxu0 0.0
    %1271 = vmatpush1.msra.mxu0 0.0
    %1272 = vmatprep.subr.mxu0 0.0
    %1273 = vmatpush1.msra.mxu0 0.0
    %1274 = vmatprep.subr.mxu0 0.0
    %1275 = vmatpush1.msra.mxu0 0.0
    %1276 = vmatprep.subr.mxu0 0.0
    %1277 = vmatpush1.msra.mxu0 0.0
    %1278 = vmatprep.subr.mxu0 0.0
    %1279 = vmatpush1.msra.mxu0 0.0
    %1280 = vmatprep.subr.mxu0 0.0
    %1281 = vmatpush1.msra.mxu0 0.0
    %1282 = vmatprep.subr.mxu0 0.0
    %1283 = vmatpush1.msra.mxu0 0.0
    %1284 = vmatprep.subr.mxu0 0.0
    %1285 = vmatpush1.msra.mxu0 0.0
    %1286 = vmatprep.subr.mxu0 0.0
    %1287 = vmatpush1.msra.mxu0 0.0
    %1288 = vmatprep.subr.mxu0 0.0
    %1289 = vmatpush1.msra.mxu0 0.0
    %1290 = vmatprep.subr.mxu0 0.0
    %1291 = vmatpush1.msra.mxu0 0.0
    %1292 = vmatprep.subr.mxu0 0.0
    %1293 = vmatpush1.msra.mxu0 0.0
    %1294 = vmatprep.subr.mxu0 0.0
    %1295 = vmatpush1.msra.mxu0 0.0
    %1296 = vmatprep.subr.mxu0 0.0
    %1297 = vmatpush1.msra.mxu0 0.0
    %1298 = vmatprep.mubr.f32.mxu0 0.0
    %1299 = vmatmul.mubr.f32.gmra.mrb[0].mxu0 %v1155
    %v1300 = vpop.f32.mrb[0].mxu0
    %v1301 = vadd.f32 0.0, %v1300
    %v1302 = vpop.f32.mrb[0].mxu0
    %v1303 = vadd.f32 0.0, %v1302
    %1304 = vdwg.mxu0
    %v1305 = vadd.f32 %v1159, %v1230
    %v1306 = vadd.f32 %v1160, %v1232
    %v1307 = vadd.f32 %v1161, %v1301
    %v1308 = vadd.f32 %v1162, %v1303
    %v1309 = vmul.f32 %v1305, 0.5
    %v1310 = vtanh.pop %v1309
    %v1311 = vadd.f32 %v1310, 1.0
    %v1312 = vmul.f32 %v1311, 0.5
    %v1313 = vmul.f32 %v1306, 0.5
    %v1314 = vtanh.pop %v1313
    %v1315 = vadd.f32 %v1314, 1.0
    %v1316 = vmul.f32 %v1315, 0.5
    %v1317 = vtanh.pop %v1307
    %v1318 = vmul.f32 %v1316, %v1149
    %v1319 = vmul.f32 %v1312, %v1317
    %v1320 = vadd.f32 %v1318, %v1319
    %v1321 = vmul.f32 %v1308, 0.5
    %v1322 = vtanh.pop %v1321
    %v1323 = vadd.f32 %v1322, 1.0
    %v1324 = vmul.f32 %v1323, 0.5
    %v1325 = vtanh.pop %v1320
    %v1326 = vmul.f32 %v1324, %v1325
    %s1327 = scalar_lea.vmem [#allocation10], 48
    %1328 = vst [vmem:[%s1327] sm:$0xff] %v1326
    %s1329 = scalar_lea.vmem [#allocation4], 224
    %v1330 = vld [vmem:[%s1329] sm:$0xff]
    %v1331 = vld [vmem:[%s1329 + $0x8] sm:$0xff]
    %v1332 = vld [vmem:[%s1329 + $0x10] sm:$0xff]
    %v1333 = vld [vmem:[%s1329 + $0x18] sm:$0xff]
    %1334 = vmatprep.subr.mxu0 %v69
    %1335 = vmatpush1.msra.mxu0 %v68
    %1336 = vmatprep.subr.mxu0 %v73
    %1337 = vmatpush1.msra.mxu0 %v72
    %1338 = vmatprep.subr.mxu0 %v77
    %1339 = vmatpush1.msra.mxu0 %v76
    %1340 = vmatprep.subr.mxu0 %v81
    %1341 = vmatpush1.msra.mxu0 %v80
    %1342 = vmatprep.subr.mxu0 %v85
    %1343 = vmatpush1.msra.mxu0 %v84
    %1344 = vmatprep.subr.mxu0 %v89
    %1345 = vmatpush1.msra.mxu0 %v88
    %1346 = vmatprep.subr.mxu0 %v93
    %1347 = vmatpush1.msra.mxu0 %v92
    %1348 = vmatprep.subr.mxu0 %v97
    %1349 = vmatpush1.msra.mxu0 %v96
    %1350 = vmatprep.subr.mxu0 %v101
    %1351 = vmatpush1.msra.mxu0 %v100
    %1352 = vmatprep.subr.mxu0 %v105
    %1353 = vmatpush1.msra.mxu0 %v104
    %1354 = vmatprep.subr.mxu0 %v109
    %1355 = vmatpush1.msra.mxu0 %v108
    %1356 = vmatprep.subr.mxu0 %v113
    %1357 = vmatpush1.msra.mxu0 %v112
    %1358 = vmatprep.subr.mxu0 %v117
    %1359 = vmatpush1.msra.mxu0 %v116
    %1360 = vmatprep.subr.mxu0 %v121
    %1361 = vmatpush1.msra.mxu0 %v120
    %1362 = vmatprep.subr.mxu0 %v125
    %1363 = vmatpush1.msra.mxu0 %v124
    %1364 = vmatprep.subr.mxu0 %v129
    %1365 = vmatpush1.msra.mxu0 %v128
    %1366 = vmatprep.subr.mxu0 0.0
    %1367 = vmatpush1.msra.mxu0 0.0
    %1368 = vmatprep.subr.mxu0 0.0
    %1369 = vmatpush1.msra.mxu0 0.0
    %1370 = vmatprep.subr.mxu0 0.0
    %1371 = vmatpush1.msra.mxu0 0.0
    %1372 = vmatprep.subr.mxu0 0.0
    %1373 = vmatpush1.msra.mxu0 0.0
    %1374 = vmatprep.subr.mxu0 0.0
    %1375 = vmatpush1.msra.mxu0 0.0
    %1376 = vmatprep.subr.mxu0 0.0
    %1377 = vmatpush1.msra.mxu0 0.0
    %1378 = vmatprep.subr.mxu0 0.0
    %1379 = vmatpush1.msra.mxu0 0.0
    %1380 = vmatprep.subr.mxu0 0.0
    %1381 = vmatpush1.msra.mxu0 0.0
    %1382 = vmatprep.subr.mxu0 0.0
    %1383 = vmatpush1.msra.mxu0 0.0
    %1384 = vmatprep.subr.mxu0 0.0
    %1385 = vmatpush1.msra.mxu0 0.0
    %1386 = vmatprep.subr.mxu0 0.0
    %1387 = vmatpush1.msra.mxu0 0.0
    %1388 = vmatprep.subr.mxu0 0.0
    %1389 = vmatpush1.msra.mxu0 0.0
    %1390 = vmatprep.subr.mxu0 0.0
    %1391 = vmatpush1.msra.mxu0 0.0
    %1392 = vmatprep.subr.mxu0 0.0
    %1393 = vmatpush1.msra.mxu0 0.0
    %1394 = vmatprep.subr.mxu0 0.0
    %1395 = vmatpush1.msra.mxu0 0.0
    %1396 = vmatprep.subr.mxu0 0.0
    %1397 = vmatpush1.msra.mxu0 0.0
    %1398 = vmatprep.mubr.f32.mxu0 0.0
    %1399 = vmatmul.mubr.f32.gmra.mrb[0].mxu0 %v1326
    %v1400 = vpop.f32.mrb[0].mxu0
    %v1401 = vadd.f32 0.0, %v1400
    %v1402 = vpop.f32.mrb[0].mxu0
    %v1403 = vadd.f32 0.0, %v1402
    %1404 = vdwg.mxu0
    %1405 = vmatprep.subr.mxu0 %v71
    %1406 = vmatpush1.msra.mxu0 %v70
    %1407 = vmatprep.subr.mxu0 %v75
    %1408 = vmatpush1.msra.mxu0 %v74
    %1409 = vmatprep.subr.mxu0 %v79
    %1410 = vmatpush1.msra.mxu0 %v78
    %1411 = vmatprep.subr.mxu0 %v83
    %1412 = vmatpush1.msra.mxu0 %v82
    %1413 = vmatprep.subr.mxu0 %v87
    %1414 = vmatpush1.msra.mxu0 %v86
    %1415 = vmatprep.subr.mxu0 %v91
    %1416 = vmatpush1.msra.mxu0 %v90
    %1417 = vmatprep.subr.mxu0 %v95
    %1418 = vmatpush1.msra.mxu0 %v94
    %1419 = vmatprep.subr.mxu0 %v99
    %1420 = vmatpush1.msra.mxu0 %v98
    %1421 = vmatprep.subr.mxu0 %v103
    %1422 = vmatpush1.msra.mxu0 %v102
    %1423 = vmatprep.subr.mxu0 %v107
    %1424 = vmatpush1.msra.mxu0 %v106
    %1425 = vmatprep.subr.mxu0 %v111
    %1426 = vmatpush1.msra.mxu0 %v110
    %1427 = vmatprep.subr.mxu0 %v115
    %1428 = vmatpush1.msra.mxu0 %v114
    %1429 = vmatprep.subr.mxu0 %v119
    %1430 = vmatpush1.msra.mxu0 %v118
    %1431 = vmatprep.subr.mxu0 %v123
    %1432 = vmatpush1.msra.mxu0 %v122
    %1433 = vmatprep.subr.mxu0 %v127
    %1434 = vmatpush1.msra.mxu0 %v126
    %1435 = vmatprep.subr.mxu0 %v131
    %1436 = vmatpush1.msra.mxu0 %v130
    %1437 = vmatprep.subr.mxu0 0.0
    %1438 = vmatpush1.msra.mxu0 0.0
    %1439 = vmatprep.subr.mxu0 0.0
    %1440 = vmatpush1.msra.mxu0 0.0
    %1441 = vmatprep.subr.mxu0 0.0
    %1442 = vmatpush1.msra.mxu0 0.0
    %1443 = vmatprep.subr.mxu0 0.0
    %1444 = vmatpush1.msra.mxu0 0.0
    %1445 = vmatprep.subr.mxu0 0.0
    %1446 = vmatpush1.msra.mxu0 0.0
    %1447 = vmatprep.subr.mxu0 0.0
    %1448 = vmatpush1.msra.mxu0 0.0
    %1449 = vmatprep.subr.mxu0 0.0
    %1450 = vmatpush1.msra.mxu0 0.0
    %1451 = vmatprep.subr.mxu0 0.0
    %1452 = vmatpush1.msra.mxu0 0.0
    %1453 = vmatprep.subr.mxu0 0.0
    %1454 = vmatpush1.msra.mxu0 0.0
    %1455 = vmatprep.subr.mxu0 0.0
    %1456 = vmatpush1.msra.mxu0 0.0
    %1457 = vmatprep.subr.mxu0 0.0
    %1458 = vmatpush1.msra.mxu0 0.0
    %1459 = vmatprep.subr.mxu0 0.0
    %1460 = vmatpush1.msra.mxu0 0.0
    %1461 = vmatprep.subr.mxu0 0.0
    %1462 = vmatpush1.msra.mxu0 0.0
    %1463 = vmatprep.subr.mxu0 0.0
    %1464 = vmatpush1.msra.mxu0 0.0
    %1465 = vmatprep.subr.mxu0 0.0
    %1466 = vmatpush1.msra.mxu0 0.0
    %1467 = vmatprep.subr.mxu0 0.0
    %1468 = vmatpush1.msra.mxu0 0.0
    %1469 = vmatprep.mubr.f32.mxu0 0.0
    %1470 = vmatmul.mubr.f32.gmra.mrb[0].mxu0 %v1326
    %v1471 = vpop.f32.mrb[0].mxu0
    %v1472 = vadd.f32 0.0, %v1471
    %v1473 = vpop.f32.mrb[0].mxu0
    %v1474 = vadd.f32 0.0, %v1473
    %1475 = vdwg.mxu0
    %v1476 = vadd.f32 %v1330, %v1401
    %v1477 = vadd.f32 %v1331, %v1403
    %v1478 = vadd.f32 %v1332, %v1472
    %v1479 = vadd.f32 %v1333, %v1474
    %v1480 = vmul.f32 %v1476, 0.5
    %v1481 = vtanh.pop %v1480
    %v1482 = vadd.f32 %v1481, 1.0
    %v1483 = vmul.f32 %v1482, 0.5
    %v1484 = vmul.f32 %v1477, 0.5
    %v1485 = vtanh.pop %v1484
    %v1486 = vadd.f32 %v1485, 1.0
    %v1487 = vmul.f32 %v1486, 0.5
    %v1488 = vtanh.pop %v1478
    %v1489 = vmul.f32 %v1487, %v1320
    %v1490 = vmul.f32 %v1483, %v1488
    %v1491 = vadd.f32 %v1489, %v1490
    %v1492 = vmul.f32 %v1479, 0.5
    %v1493 = vtanh.pop %v1492
    %v1494 = vadd.f32 %v1493, 1.0
    %v1495 = vmul.f32 %v1494, 0.5
    %v1496 = vtanh.pop %v1491
    %v1497 = vmul.f32 %v1495, %v1496
    %s1498 = scalar_lea.vmem [#allocation10], 56
    %1499 = vst [vmem:[%s1498] sm:$0xff] %v1497
    %1500 = vst [vmem:[#allocation2] sm:$0xff] %v1497
    %1501 = vst [vmem:[#allocation3] sm:$0xff] %v1491
    // Predicated region
    $region34: #{tpu_custom_call.1} parent=1 // pred_check
      %p1502 = pneg %p60
    $region35: #{tpu_custom_call.1} parent=1 // pred_check_branch
      %1504 = sbr.rel (%p1502) target = $region37
    $region36: #{tpu_custom_call.1} parent=1 // pred_region
      %1505 = vst [vmem:[#allocation11] sm:$0xff] %v1491
    $region37: #{tpu_custom_call.1} parent=1 // pred_fallthru
      _
    // Predicated region
    $region38: #{tpu_custom_call.1} parent=1 // pred_check
      _
    $region39: #{tpu_custom_call.1} parent=1 // pred_check_branch
      %1507 = sbr.rel (0) target = $region41
    $region40: #{tpu_custom_call.1} parent=1 // pred_region
      %s1509 = ssub.s32 1024, 1024
      %1510 = vsyncadd [#allocation6], %s1509
      %s1511 = sshll.u32 [#allocation10], 4
      %s1512 = int_to_ptr.vmem [resolvable:$true] %s1511
      %1517 = dma.vmem_to_hbm [thread:$0]  %s1512, 1024, %s4, [#allocation6], 128, 128, 8
    $region41: #{tpu_custom_call.1} parent=1 // pred_fallthru
      _
    // Predicated region
    $region42: #{tpu_custom_call.1} parent=1 // pred_check
      _
    $region43: #{tpu_custom_call.1} parent=1 // pred_check_branch
      %1519 = sbr.rel (0) target = $region45
    $region44: #{tpu_custom_call.1} parent=1 // pred_region
      %s1521 = ssub.s32 128, 128
      %1522 = vsyncadd [#allocation12], %s1521
      %s1524 = sshll.u32 [#allocation11], 4
      %s1525 = int_to_ptr.vmem [resolvable:$true] %s1524
      %1527 = dma.vmem_to_hbm [thread:$0]  %s1525, 128, %s5, [#allocation12]
    $region45: #{tpu_custom_call.1} parent=1 // pred_fallthru
      _
    // Predicated region
    $region46: #{tpu_custom_call.1} parent=1 // pred_check
      _
    $region47: #{tpu_custom_call.1} parent=1 // pred_check_branch
      %1529 = sbr.rel (0) target = $region49
    $region48: #{tpu_custom_call.1} parent=1 // pred_region
      %1530 = dma.done [#allocation6], 1024
    $region49: #{tpu_custom_call.1} parent=1 // pred_fallthru
      _
    // Predicated region
    $region50: #{tpu_custom_call.1} parent=1 // pred_check
      _
    $region51: #{tpu_custom_call.1} parent=1 // pred_check_branch
      %1532 = sbr.rel (0) target = $region53
    $region52: #{tpu_custom_call.1} parent=1 // pred_region
      %1533 = dma.done [#allocation12], 128
    $region53: #{tpu_custom_call.1} parent=1 // pred_fallthru
      _
    %1534 = vsyncpa [#allocation5], 1
    %1535 = vsyncpa [#allocation8], 1
    %1536 = vsyncpa [#allocation6], 1
    %1537 = vsyncpa [#allocation12], 1

</llo_original>
